<compile_context>
chip_gen: v5e
topology: v5e:2x2
jax: 0.10.0
libtpu: 0.0.40
codegen_flags: <defaults>
</compile_context>

<pallas_src>
import jax
import jax.numpy as jnp
from jax.experimental import pallas as pl
from jax.experimental.pallas import tpu as pltpu

IN_CH = 128           # input channels (conv1 expects 128)
EMB_DIMS = 256        # args.emb_dims
OUT_CH = 40           # output_channels
PADDED_OUT = 128      # lane-dense padded output width
N_POINTS = 128        # number of points
BATCH = 2
BN_EPS = 1e-5


def pointnet_kernel(x_ref,
                    w1_ref, b1_ref, w2_ref, b2_ref, w3_ref, b3_ref,
                    w4_ref, b4_ref, w5_ref, b5_ref,
                    w6_ref, b6_ref, w7_ref, b7_ref,
                    out_ref):
    bsz, _, n = x_ref.shape                              # (B, C, N) f32, NCW layout

    # In-kernel NCW -> channels-last flatten: per-batch (C, N) -> (N, C) XLU transposes
    # (free slot relative to the MXU), then stack batches along sublanes and cast bf16.
    x_flat = jnp.concatenate([x_ref[b].T for b in range(bsz)], axis=0)  # (B*N, C) f32
    h_bf16 = x_flat.astype(jnp.bfloat16)

    def conv_bn_relu(h, w_ref, b_ref):
        # 1x1 conv (bias=False) with BN folded in == matmul + per-channel bias; ReLU.
        y = jnp.dot(h, w_ref[...], preferred_element_type=jnp.float32)
        return jnp.maximum(y + b_ref[...], 0.0)          # f32 epilogue (v5e-safe)

    h = conv_bn_relu(h_bf16, w1_ref, b1_ref)                           # (B*N, 64)
    h = conv_bn_relu(h.astype(jnp.bfloat16), w2_ref, b2_ref)           # (B*N, 64)
    h = conv_bn_relu(h.astype(jnp.bfloat16), w3_ref, b3_ref)           # (B*N, 64)
    h = conv_bn_relu(h.astype(jnp.bfloat16), w4_ref, b4_ref)           # (B*N, 128)
    h = conv_bn_relu(h.astype(jnp.bfloat16), w5_ref, b5_ref)           # (B*N, emb)

    # adaptive_max_pool1d(x, 1).squeeze(): one sublane-reduce over the points axis.
    g = jnp.max(h.reshape(bsz, n, h.shape[-1]), axis=1)                # (B, emb) f32

    # linear1 (bias=False) + folded bn6 + relu.
    h6 = jnp.dot(g.astype(jnp.bfloat16), w6_ref[...],
                 preferred_element_type=jnp.float32)
    h6 = jnp.maximum(h6 + b6_ref[...], 0.0)                            # (B, 512) f32

    # TODO(synk): nn.Dropout() is stochastic only in train mode; eval mode == identity.

    # linear2 (with bias); output zero-padded to 128 lanes for a lane-dense store.
    out = jnp.dot(h6.astype(jnp.bfloat16), w7_ref[...],
                  preferred_element_type=jnp.float32) + b7_ref[...]
    out_ref[...] = out.astype(out_ref.dtype)                           # (B, 128)


def pointnet_forward(x_bcn, params):
    """x_bcn: (B, 128, N) float32, PyTorch NCW layout — passed to the kernel as-is."""
    B, C, N = x_bcn.shape
    assert C == IN_CH

    # Advisory cost so XLA schedules neighbors around this tiny, overhead-bound call.
    flops = 2 * (B * N * (C * 64 + 64 * 64 + 64 * 64 + 64 * 128 + 128 * EMB_DIMS)
                 + B * (EMB_DIMS * 512 + 512 * PADDED_OUT))
    bytes_accessed = (x_bcn.size * x_bcn.dtype.itemsize
                      + sum(int(p.size) * p.dtype.itemsize for p in params)
                      + B * PADDED_OUT * 4)
    cost = pl.CostEstimate(flops=flops, transcendentals=0,
                           bytes_accessed=bytes_accessed)

    vmem_spec = pl.BlockSpec(memory_space=pltpu.MemorySpace.VMEM)
    # Single kernel invocation (no grid): weights DMA'd exactly once, no per-step
    # overhead.  NOTE(v7x): megacore-split over B only once B*N >= ~4-8K rows; at
    # M=256 the duplicated weight DMA + per-step overhead would outweigh the win.
    # NOTE(scale-up): for realistic sizes (B=32, N=1024+) tile B*N with resident
    # weight BlockSpecs and a running-max scratch instead of this monolithic body.
    out_padded = pl.pallas_call(
        pointnet_kernel,
        out_shape=jax.ShapeDtypeStruct((B, PADDED_OUT), jnp.float32),
        in_specs=[vmem_spec] * (1 + len(params)),
        out_specs=vmem_spec,
        cost_estimate=cost,
    )(x_bcn, *params)
    # Lane-dense padded store inside; drop this slice if the consumer can take (B,128).
    return out_padded[:, :OUT_CH]


def fold_bn_into_weight(w, gamma, beta, mean, var, eps=BN_EPS):
    """Fold eval-mode BatchNorm into the preceding bias-free matmul weight."""
    scale = gamma / jnp.sqrt(var + eps)                                # (cout,)
    w_folded = (w * scale[None, :]).astype(jnp.bfloat16)               # (cin, cout) bf16
    bias = (beta - mean * scale)[None, :].astype(jnp.float32)          # (1, cout) f32
    return w_folded, bias


def make_params(key):
    """Deterministic synthetic parameters matching PointNet.__init__ shapes."""
    conv_dims = [(IN_CH, 64), (64, 64), (64, 64), (64, 128), (128, EMB_DIMS)]
    keys = jax.random.split(key, 32)
    ki = iter(range(32))
    params = []
    for cin, cout in conv_dims:
        # Conv1d(cin, cout, k=1, bias=False): weight (cout, cin, 1) used as (cin, cout).
        w = jax.random.normal(keys[next(ki)], (cin, cout), jnp.float32) / jnp.sqrt(cin)
        gamma = 1.0 + 0.1 * jax.random.normal(keys[next(ki)], (cout,), jnp.float32)
        beta = 0.1 * jax.random.normal(keys[next(ki)], (cout,), jnp.float32)
        mean = 0.1 * jax.random.normal(keys[next(ki)], (cout,), jnp.float32)
        var = jnp.abs(jax.random.normal(keys[next(ki)], (cout,), jnp.float32)) + 0.5
        params += list(fold_bn_into_weight(w, gamma, beta, mean, var))
    # linear1: emb_dims -> 512, bias=False, followed by bn6.
    w6 = jax.random.normal(keys[next(ki)], (EMB_DIMS, 512), jnp.float32) / jnp.sqrt(EMB_DIMS)
    gamma6 = 1.0 + 0.1 * jax.random.normal(keys[next(ki)], (512,), jnp.float32)
    beta6 = 0.1 * jax.random.normal(keys[next(ki)], (512,), jnp.float32)
    mean6 = 0.1 * jax.random.normal(keys[next(ki)], (512,), jnp.float32)
    var6 = jnp.abs(jax.random.normal(keys[next(ki)], (512,), jnp.float32)) + 0.5
    params += list(fold_bn_into_weight(w6, gamma6, beta6, mean6, var6))
    # linear2: 512 -> 40 (with bias), zero-padded to 128 output lanes.
    w7 = jax.random.normal(keys[next(ki)], (512, OUT_CH), jnp.float32) / jnp.sqrt(512.0)
    b7 = 0.1 * jax.random.normal(keys[next(ki)], (OUT_CH,), jnp.float32)
    w7p = jnp.zeros((512, PADDED_OUT), jnp.float32).at[:, :OUT_CH].set(w7).astype(jnp.bfloat16)
    b7p = jnp.zeros((1, PADDED_OUT), jnp.float32).at[0, :OUT_CH].set(b7)
    params += [w7p, b7p]
    return tuple(params)


def pointnet_reference(x_bcn, params):
    """Plain-JAX mirror of the kernel's math (folded eval-mode BN, bf16 matmuls).
    NOTE: this validates the kernel, not the unfolded f32 torch model — vs torch
    expect slightly larger (bf16-level) error and use an appropriate tolerance."""
    (w1, b1, w2, b2, w3, b3, w4, b4, w5, b5, w6, b6, w7p, b7p) = params
    B, C, N = x_bcn.shape
    h = jnp.transpose(x_bcn, (0, 2, 1)).reshape(B * N, C).astype(jnp.bfloat16)

    def block(h_bf16, w, b):
        return jnp.maximum(
            jnp.dot(h_bf16, w, preferred_element_type=jnp.float32) + b, 0.0)

    h = block(h, w1, b1)
    h = block(h.astype(jnp.bfloat16), w2, b2)
    h = block(h.astype(jnp.bfloat16), w3, b3)
    h = block(h.astype(jnp.bfloat16), w4, b4)
    h = block(h.astype(jnp.bfloat16), w5, b5)                          # (B*N, emb) f32
    g = jnp.max(h.reshape(B, N, -1), axis=1)                           # (B, emb)
    h6 = jnp.maximum(
        jnp.dot(g.astype(jnp.bfloat16), w6, preferred_element_type=jnp.float32) + b6,
        0.0)                                                           # (B, 512)
    out = jnp.dot(h6.astype(jnp.bfloat16), w7p,
                  preferred_element_type=jnp.float32) + b7p            # (B, 128)
    return out[:, :OUT_CH]


if __name__ == "__main__":
    key = jax.random.PRNGKey(0)
    kx, kp = jax.random.split(key)
    x = jax.random.normal(kx, (BATCH, IN_CH, N_POINTS), jnp.float32)   # (B, C, N)
    params = make_params(kp)

    out = jax.block_until_ready(pointnet_forward(x, params))
    ref = pointnet_reference(x, params)

    assert out.shape == (BATCH, OUT_CH), out.shape
    max_diff = float(jnp.max(jnp.abs(out - ref)))
    assert jnp.allclose(out, ref, atol=1e-2, rtol=1e-2), f"max abs diff {max_diff}"
    print("KERNEL_OK")
</pallas_src>

<mosaic_0001>
module attributes {stable_mosaic.version = 11 : i64} {
  func.func @pointnet_kernel(%arg0: memref<2x128x128xf32, #tpu.memory_space<vmem>>, %arg1: memref<128x64xbf16, #tpu.memory_space<vmem>>, %arg2: memref<1x64xf32, #tpu.memory_space<vmem>>, %arg3: memref<64x64xbf16, #tpu.memory_space<vmem>>, %arg4: memref<1x64xf32, #tpu.memory_space<vmem>>, %arg5: memref<64x64xbf16, #tpu.memory_space<vmem>>, %arg6: memref<1x64xf32, #tpu.memory_space<vmem>>, %arg7: memref<64x128xbf16, #tpu.memory_space<vmem>>, %arg8: memref<1x128xf32, #tpu.memory_space<vmem>>, %arg9: memref<128x256xbf16, #tpu.memory_space<vmem>>, %arg10: memref<1x256xf32, #tpu.memory_space<vmem>>, %arg11: memref<256x512xbf16, #tpu.memory_space<vmem>>, %arg12: memref<1x512xf32, #tpu.memory_space<vmem>>, %arg13: memref<512x128xbf16, #tpu.memory_space<vmem>>, %arg14: memref<1x128xf32, #tpu.memory_space<vmem>>, %arg15: memref<2x128xf32, #tpu.memory_space<vmem>>) attributes {dimension_semantics = [], scalar_prefetch = 0 : i64, scratch_operands = 0 : i64, tpu.core_type = #tpu.core_type<tc>} {
    %c0 = arith.constant 0 : index
    %c0_0 = arith.constant 0 : index
    %c0_1 = arith.constant 0 : index
    %0 = vector.load %arg0[%c0, %c0_0, %c0_1] : memref<2x128x128xf32, #tpu.memory_space<vmem>>, vector<1x128x128xf32>
    %1 = vector.shape_cast %0 : vector<1x128x128xf32> to vector<128x128xf32>
    %2 = tpu.transpose %1, [1, 0] : vector<128x128xf32> -> vector<128x128xf32>
    %c1 = arith.constant 1 : index
    %c0_2 = arith.constant 0 : index
    %c0_3 = arith.constant 0 : index
    %3 = vector.load %arg0[%c1, %c0_2, %c0_3] : memref<2x128x128xf32, #tpu.memory_space<vmem>>, vector<1x128x128xf32>
    %4 = vector.shape_cast %3 : vector<1x128x128xf32> to vector<128x128xf32>
    %5 = tpu.transpose %4, [1, 0] : vector<128x128xf32> -> vector<128x128xf32>
    %6 = tpu.concatenate %2, %5 in 0 : vector<128x128xf32>, vector<128x128xf32> -> vector<256x128xf32>
    %7 = arith.truncf %6 : vector<256x128xf32> to vector<256x128xbf16>
    %c0_4 = arith.constant 0 : index
    %c0_5 = arith.constant 0 : index
    %8 = vector.load %arg1[%c0_4, %c0_5] : memref<128x64xbf16, #tpu.memory_space<vmem>>, vector<128x64xbf16>
    %cst = arith.constant dense<0.000000e+00> : vector<256x64xf32>
    %9 = tpu.matmul %7, %8, %cst {dimension_numbers = #tpu.dot_dimension_numbers<[1], [0], [0], [1], [0, 0, 1, 1], [], []>} : vector<256x128xbf16>, vector<128x64xbf16>, vector<256x64xf32> -> vector<256x64xf32>
    %c0_6 = arith.constant 0 : index
    %c0_7 = arith.constant 0 : index
    %10 = vector.load %arg2[%c0_6, %c0_7] : memref<1x64xf32, #tpu.memory_space<vmem>>, vector<1x64xf32>
    %11 = vector.broadcast %10 : vector<1x64xf32> to vector<256x64xf32>
    %12 = arith.addf %9, %11 : vector<256x64xf32>
    %cst_8 = arith.constant 0.000000e+00 : f32
    %13 = vector.broadcast %cst_8 : f32 to vector<256x64xf32>
    %14 = arith.maximumf %12, %13 : vector<256x64xf32>
    %15 = arith.truncf %14 : vector<256x64xf32> to vector<256x64xbf16>
    %c0_9 = arith.constant 0 : index
    %c0_10 = arith.constant 0 : index
    %16 = vector.load %arg3[%c0_9, %c0_10] : memref<64x64xbf16, #tpu.memory_space<vmem>>, vector<64x64xbf16>
    %cst_11 = arith.constant dense<0.000000e+00> : vector<256x64xf32>
    %17 = tpu.matmul %15, %16, %cst_11 {dimension_numbers = #tpu.dot_dimension_numbers<[1], [0], [0], [1], [0, 0, 1, 1], [], []>} : vector<256x64xbf16>, vector<64x64xbf16>, vector<256x64xf32> -> vector<256x64xf32>
    %c0_12 = arith.constant 0 : index
    %c0_13 = arith.constant 0 : index
    %18 = vector.load %arg4[%c0_12, %c0_13] : memref<1x64xf32, #tpu.memory_space<vmem>>, vector<1x64xf32>
    %19 = vector.broadcast %18 : vector<1x64xf32> to vector<256x64xf32>
    %20 = arith.addf %17, %19 : vector<256x64xf32>
    %cst_14 = arith.constant 0.000000e+00 : f32
    %21 = vector.broadcast %cst_14 : f32 to vector<256x64xf32>
    %22 = arith.maximumf %20, %21 : vector<256x64xf32>
    %23 = arith.truncf %22 : vector<256x64xf32> to vector<256x64xbf16>
    %c0_15 = arith.constant 0 : index
    %c0_16 = arith.constant 0 : index
    %24 = vector.load %arg5[%c0_15, %c0_16] : memref<64x64xbf16, #tpu.memory_space<vmem>>, vector<64x64xbf16>
    %cst_17 = arith.constant dense<0.000000e+00> : vector<256x64xf32>
    %25 = tpu.matmul %23, %24, %cst_17 {dimension_numbers = #tpu.dot_dimension_numbers<[1], [0], [0], [1], [0, 0, 1, 1], [], []>} : vector<256x64xbf16>, vector<64x64xbf16>, vector<256x64xf32> -> vector<256x64xf32>
    %c0_18 = arith.constant 0 : index
    %c0_19 = arith.constant 0 : index
    %26 = vector.load %arg6[%c0_18, %c0_19] : memref<1x64xf32, #tpu.memory_space<vmem>>, vector<1x64xf32>
    %27 = vector.broadcast %26 : vector<1x64xf32> to vector<256x64xf32>
    %28 = arith.addf %25, %27 : vector<256x64xf32>
    %cst_20 = arith.constant 0.000000e+00 : f32
    %29 = vector.broadcast %cst_20 : f32 to vector<256x64xf32>
    %30 = arith.maximumf %28, %29 : vector<256x64xf32>
    %31 = arith.truncf %30 : vector<256x64xf32> to vector<256x64xbf16>
    %c0_21 = arith.constant 0 : index
    %c0_22 = arith.constant 0 : index
    %32 = vector.load %arg7[%c0_21, %c0_22] : memref<64x128xbf16, #tpu.memory_space<vmem>>, vector<64x128xbf16>
    %cst_23 = arith.constant dense<0.000000e+00> : vector<256x128xf32>
    %33 = tpu.matmul %31, %32, %cst_23 {dimension_numbers = #tpu.dot_dimension_numbers<[1], [0], [0], [1], [0, 0, 1, 1], [], []>} : vector<256x64xbf16>, vector<64x128xbf16>, vector<256x128xf32> -> vector<256x128xf32>
    %c0_24 = arith.constant 0 : index
    %c0_25 = arith.constant 0 : index
    %34 = vector.load %arg8[%c0_24, %c0_25] : memref<1x128xf32, #tpu.memory_space<vmem>>, vector<1x128xf32>
    %35 = vector.broadcast %34 : vector<1x128xf32> to vector<256x128xf32>
    %36 = arith.addf %33, %35 : vector<256x128xf32>
    %cst_26 = arith.constant 0.000000e+00 : f32
    %37 = vector.broadcast %cst_26 : f32 to vector<256x128xf32>
    %38 = arith.maximumf %36, %37 : vector<256x128xf32>
    %39 = arith.truncf %38 : vector<256x128xf32> to vector<256x128xbf16>
    %c0_27 = arith.constant 0 : index
    %c0_28 = arith.constant 0 : index
    %40 = vector.load %arg9[%c0_27, %c0_28] : memref<128x256xbf16, #tpu.memory_space<vmem>>, vector<128x256xbf16>
    %cst_29 = arith.constant dense<0.000000e+00> : vector<256x256xf32>
    %41 = tpu.matmul %39, %40, %cst_29 {dimension_numbers = #tpu.dot_dimension_numbers<[1], [0], [0], [1], [0, 0, 1, 1], [], []>} : vector<256x128xbf16>, vector<128x256xbf16>, vector<256x256xf32> -> vector<256x256xf32>
    %c0_30 = arith.constant 0 : index
    %c0_31 = arith.constant 0 : index
    %42 = vector.load %arg10[%c0_30, %c0_31] : memref<1x256xf32, #tpu.memory_space<vmem>>, vector<1x256xf32>
    %43 = vector.broadcast %42 : vector<1x256xf32> to vector<256x256xf32>
    %44 = arith.addf %41, %43 : vector<256x256xf32>
    %cst_32 = arith.constant 0.000000e+00 : f32
    %45 = vector.broadcast %cst_32 : f32 to vector<256x256xf32>
    %46 = arith.maximumf %44, %45 : vector<256x256xf32>
    %47 = vector.shape_cast %46 : vector<256x256xf32> to vector<2x128x256xf32>
    %cst_33 = arith.constant dense<0xFF800000> : vector<2x256xf32>
    %48 = vector.multi_reduction <maximumf>, %47, %cst_33 [1] : vector<2x128x256xf32> to vector<2x256xf32>
    %49 = arith.truncf %48 : vector<2x256xf32> to vector<2x256xbf16>
    %c0_34 = arith.constant 0 : index
    %c0_35 = arith.constant 0 : index
    %50 = vector.load %arg11[%c0_34, %c0_35] : memref<256x512xbf16, #tpu.memory_space<vmem>>, vector<256x512xbf16>
    %cst_36 = arith.constant dense<0.000000e+00> : vector<2x512xf32>
    %51 = tpu.matmul %49, %50, %cst_36 {dimension_numbers = #tpu.dot_dimension_numbers<[1], [0], [0], [1], [0, 0, 1, 1], [], []>} : vector<2x256xbf16>, vector<256x512xbf16>, vector<2x512xf32> -> vector<2x512xf32>
    %c0_37 = arith.constant 0 : index
    %c0_38 = arith.constant 0 : index
    %52 = vector.load %arg12[%c0_37, %c0_38] : memref<1x512xf32, #tpu.memory_space<vmem>>, vector<1x512xf32>
    %53 = vector.broadcast %52 : vector<1x512xf32> to vector<2x512xf32>
    %54 = arith.addf %51, %53 : vector<2x512xf32>
    %cst_39 = arith.constant 0.000000e+00 : f32
    %55 = vector.broadcast %cst_39 : f32 to vector<2x512xf32>
    %56 = arith.maximumf %54, %55 : vector<2x512xf32>
    %57 = arith.truncf %56 : vector<2x512xf32> to vector<2x512xbf16>
    %c0_40 = arith.constant 0 : index
    %c0_41 = arith.constant 0 : index
    %58 = vector.load %arg13[%c0_40, %c0_41] : memref<512x128xbf16, #tpu.memory_space<vmem>>, vector<512x128xbf16>
    %cst_42 = arith.constant dense<0.000000e+00> : vector<2x128xf32>
    %59 = tpu.matmul %57, %58, %cst_42 {dimension_numbers = #tpu.dot_dimension_numbers<[1], [0], [0], [1], [0, 0, 1, 1], [], []>} : vector<2x512xbf16>, vector<512x128xbf16>, vector<2x128xf32> -> vector<2x128xf32>
    %c0_43 = arith.constant 0 : index
    %c0_44 = arith.constant 0 : index
    %60 = vector.load %arg14[%c0_43, %c0_44] : memref<1x128xf32, #tpu.memory_space<vmem>>, vector<1x128xf32>
    %61 = vector.broadcast %60 : vector<1x128xf32> to vector<2x128xf32>
    %62 = arith.addf %59, %61 : vector<2x128xf32>
    %c0_45 = arith.constant 0 : index
    %c0_46 = arith.constant 0 : index
    %63 = vector.load %arg15[%c0_45, %c0_46] : memref<2x128xf32, #tpu.memory_space<vmem>>, vector<2x128xf32>
    tpu.vector_store %arg15[%c0_45, %c0_46], %62 {strides = array<i32>} : memref<2x128xf32, #tpu.memory_space<vmem>>, vector<2x128xf32>,
    return
  }
}

</mosaic_0001>

<llo_original>
// kernel: tpu_custom_call.1
$region0: #{tpu_custom_call.1}
  #allocation0 [shape = 'u32[]', space=smem, size = 0x4, offset = 0x4, fixed_abs, tag = 'smem constant byte address 0x4 - core index']
  #allocation1 [shape = 'u32[72,128]{1,0:T(1,128)}', space=vmem, size = 0x9000, scoped, tag = 'internal scratch']
  %s0 = inlined_call_operand.hbm [shape: f32[2,128,128], index: 0, kind: input, shape index: {}]
  %s1 = inlined_call_operand.vmem [shape: bf16[128,64], index: 1, kind: input, shape index: {}]
  %s2 = inlined_call_operand.vmem [shape: f32[1,64], index: 2, kind: input, shape index: {}]
  %s3 = inlined_call_operand.vmem [shape: bf16[64,64], index: 3, kind: input, shape index: {}]
  %s4 = inlined_call_operand.hbm [shape: f32[1,64], index: 4, kind: input, shape index: {}]
  %s5 = inlined_call_operand.vmem [shape: bf16[64,64], index: 5, kind: input, shape index: {}]
  %s6 = inlined_call_operand.hbm [shape: f32[1,64], index: 6, kind: input, shape index: {}]
  %s7 = inlined_call_operand.vmem [shape: bf16[64,128], index: 7, kind: input, shape index: {}]
  %s8 = inlined_call_operand.hbm [shape: f32[1,128], index: 8, kind: input, shape index: {}]
  %s9 = inlined_call_operand.hbm [shape: bf16[128,256], index: 9, kind: input, shape index: {}]
  %s10 = inlined_call_operand.vmem [shape: f32[1,256], index: 10, kind: input, shape index: {}]
  %s11 = inlined_call_operand.hbm [shape: bf16[256,512], index: 11, kind: input, shape index: {}]
  %s12 = inlined_call_operand.vmem [shape: f32[1,512], index: 12, kind: input, shape index: {}]
  %s13 = inlined_call_operand.hbm [shape: bf16[512,128], index: 13, kind: input, shape index: {}]
  %s14 = inlined_call_operand.vmem [shape: f32[1,128], index: 14, kind: input, shape index: {}]
  %s15 = inlined_call_operand.hbm [shape: f32[2,128], index: 15, kind: output, shape index: {}]
  %s16 = sld [smem:[#allocation0]]
  $region98: #{tpu_custom_call.1} parent=0
    _
  %s18 = ssub.s32 1, %s16
  %s19 = scalar_select 0, %s18, %s16
  $region1: #{tpu_custom_call.1} parent=0
    #allocation2 [shape = 'u8[131072]{0}', space=vmem, size = 0x20000, scoped, tag = 'input window, operand 0, single buffered']
    #allocation3 [shape = 's32[1]{0}', space=sflag, size = 0x4, scoped, tag = 'scoped memory for tpu_custom_call.1']
    #allocation4 [shape = 's32[1]{0}', space=sflag, size = 0x4, scoped, tag = 'scoped memory for tpu_custom_call.1']
    #allocation5 [shape = 'u8[512]{0}', space=vmem, size = 0x400, scoped, tag = 'input window, operand 4, single buffered']
    #allocation6 [shape = 's32[1]{0}', space=sflag, size = 0x4, scoped, tag = 'scoped memory for tpu_custom_call.1']
    #allocation7 [shape = 'u8[512]{0}', space=vmem, size = 0x400, scoped, tag = 'input window, operand 6, single buffered']
    #allocation8 [shape = 'u8[512]{0}', space=vmem, size = 0x400, scoped, tag = 'input window, operand 8, single buffered']
    #allocation9 [shape = 's32[1]{0}', space=sflag, size = 0x4, scoped, tag = 'scoped memory for tpu_custom_call.1']
    #allocation10 [shape = 'u8[65536]{0}', space=vmem, size = 0x10000, scoped, tag = 'input window, operand 9, single buffered']
    #allocation11 [shape = 'u8[262144]{0}', space=vmem, size = 0x40000, scoped, tag = 'input window, operand 11, single buffered']
    #allocation12 [shape = 's32[1]{0}', space=sflag, size = 0x4, scoped, tag = 'scoped memory for tpu_custom_call.1']
    #allocation13 [shape = 'u8[131072]{0}', space=vmem, size = 0x20000, scoped, tag = 'input window, operand 13, single buffered']
    #allocation14 [shape = 'u8[1024]{0}', space=vmem, size = 0x400, scoped, tag = 'output window, operand 0, single buffered']
    %20 = vsyncpa [#allocation3], 0
    %21 = vsyncpa [#allocation6], 0
    %22 = vsyncpa [#allocation9], 0
    %23 = vsyncpa [#allocation12], 0
    %24 = vsyncpa [#allocation4], 0
    // Predicated region
    $region2: #{tpu_custom_call.1} parent=1 // pred_check
      _
    $region3: #{tpu_custom_call.1} parent=1 // pred_check_branch
      %26 = sbr.rel (0) target = $region5
    $region4: #{tpu_custom_call.1} parent=1 // pred_region
      %28 = vsyncadd [#allocation3], 0
      %s29 = sshll.u32 %s0, 4
      %s30 = int_to_ptr.hbm [resolvable:$true] %s29
      %s31 = sshll.u32 [#allocation2], 4
      %s32 = int_to_ptr.vmem [resolvable:$true] %s31
      %37 = dma.hbm_to_vmem [thread:$0]  %s30, 4096, %s32, [#allocation3], 128, 128, 8
    $region5: #{tpu_custom_call.1} parent=1 // pred_fallthru
      _
    // Predicated region
    $region6: #{tpu_custom_call.1} parent=1 // pred_check
      _
    $region7: #{tpu_custom_call.1} parent=1 // pred_check_branch
      %39 = sbr.rel (0) target = $region9
    $region8: #{tpu_custom_call.1} parent=1 // pred_region
      _
    $region9: #{tpu_custom_call.1} parent=1 // pred_fallthru
      _
    // Predicated region
    $region10: #{tpu_custom_call.1} parent=1 // pred_check
      _
    $region11: #{tpu_custom_call.1} parent=1 // pred_check_branch
      %41 = sbr.rel (0) target = $region13
    $region12: #{tpu_custom_call.1} parent=1 // pred_region
      _
    $region13: #{tpu_custom_call.1} parent=1 // pred_fallthru
      _
    // Predicated region
    $region14: #{tpu_custom_call.1} parent=1 // pred_check
      _
    $region15: #{tpu_custom_call.1} parent=1 // pred_check_branch
      %43 = sbr.rel (0) target = $region17
    $region16: #{tpu_custom_call.1} parent=1 // pred_region
      _
    $region17: #{tpu_custom_call.1} parent=1 // pred_fallthru
      _
    // Predicated region
    $region18: #{tpu_custom_call.1} parent=1 // pred_check
      _
    $region19: #{tpu_custom_call.1} parent=1 // pred_check_branch
      %45 = sbr.rel (0) target = $region21
    $region20: #{tpu_custom_call.1} parent=1 // pred_region
      %47 = vsyncadd [#allocation6], 0
      %s49 = sshll.u32 %s4, 4
      %s50 = int_to_ptr.hbm [resolvable:$true] %s49
      %s51 = sshll.u32 [#allocation5], 4
      %s52 = int_to_ptr.vmem [resolvable:$true] %s51
      %54 = dma.hbm_to_vmem [thread:$0]  %s50, 16, %s52, [#allocation6]
    $region21: #{tpu_custom_call.1} parent=1 // pred_fallthru
      _
    // Predicated region
    $region22: #{tpu_custom_call.1} parent=1 // pred_check
      _
    $region23: #{tpu_custom_call.1} parent=1 // pred_check_branch
      %56 = sbr.rel (0) target = $region25
    $region24: #{tpu_custom_call.1} parent=1 // pred_region
      _
    $region25: #{tpu_custom_call.1} parent=1 // pred_fallthru
      _
    // Predicated region
    $region26: #{tpu_custom_call.1} parent=1 // pred_check
      _
    $region27: #{tpu_custom_call.1} parent=1 // pred_check_branch
      %58 = sbr.rel (0) target = $region29
    $region28: #{tpu_custom_call.1} parent=1 // pred_region
      %60 = vsyncadd [#allocation6], 0
      %s62 = sshll.u32 %s6, 4
      %s63 = int_to_ptr.hbm [resolvable:$true] %s62
      %s64 = sshll.u32 [#allocation7], 4
      %s65 = int_to_ptr.vmem [resolvable:$true] %s64
      %67 = dma.hbm_to_vmem [thread:$0]  %s63, 16, %s65, [#allocation6]
    $region29: #{tpu_custom_call.1} parent=1 // pred_fallthru
      _
    // Predicated region
    $region30: #{tpu_custom_call.1} parent=1 // pred_check
      _
    $region31: #{tpu_custom_call.1} parent=1 // pred_check_branch
      %69 = sbr.rel (0) target = $region33
    $region32: #{tpu_custom_call.1} parent=1 // pred_region
      _
    $region33: #{tpu_custom_call.1} parent=1 // pred_fallthru
      _
    // Predicated region
    $region34: #{tpu_custom_call.1} parent=1 // pred_check
      _
    $region35: #{tpu_custom_call.1} parent=1 // pred_check_branch
      %71 = sbr.rel (0) target = $region37
    $region36: #{tpu_custom_call.1} parent=1 // pred_region
      %73 = vsyncadd [#allocation9], 0
      %s75 = sshll.u32 %s8, 4
      %s76 = int_to_ptr.hbm [resolvable:$true] %s75
      %s77 = sshll.u32 [#allocation8], 4
      %s78 = int_to_ptr.vmem [resolvable:$true] %s77
      %80 = dma.hbm_to_vmem [thread:$0]  %s76, 16, %s78, [#allocation9]
    $region37: #{tpu_custom_call.1} parent=1 // pred_fallthru
      _
    // Predicated region
    $region38: #{tpu_custom_call.1} parent=1 // pred_check
      _
    $region39: #{tpu_custom_call.1} parent=1 // pred_check_branch
      %82 = sbr.rel (0) target = $region41
    $region40: #{tpu_custom_call.1} parent=1 // pred_region
      %84 = vsyncadd [#allocation9], 0
      %s85 = sshll.u32 %s9, 4
      %s86 = int_to_ptr.hbm [resolvable:$true] %s85
      %s87 = sshll.u32 [#allocation10], 4
      %s88 = int_to_ptr.vmem [resolvable:$true] %s87
      %93 = dma.hbm_to_vmem [thread:$0]  %s86, 2048, %s88, [#allocation9], 128, 128, 8
    $region41: #{tpu_custom_call.1} parent=1 // pred_fallthru
      _
    // Predicated region
    $region42: #{tpu_custom_call.1} parent=1 // pred_check
      _
    $region43: #{tpu_custom_call.1} parent=1 // pred_check_branch
      %95 = sbr.rel (0) target = $region45
    $region44: #{tpu_custom_call.1} parent=1 // pred_region
      _
    $region45: #{tpu_custom_call.1} parent=1 // pred_fallthru
      _
    // Predicated region
    $region46: #{tpu_custom_call.1} parent=1 // pred_check
      _
    $region47: #{tpu_custom_call.1} parent=1 // pred_check_branch
      %97 = sbr.rel (0) target = $region49
    $region48: #{tpu_custom_call.1} parent=1 // pred_region
      %99 = vsyncadd [#allocation12], 0
      %s100 = sshll.u32 %s11, 4
      %s101 = int_to_ptr.hbm [resolvable:$true] %s100
      %s102 = sshll.u32 [#allocation11], 4
      %s103 = int_to_ptr.vmem [resolvable:$true] %s102
      %108 = dma.hbm_to_vmem [thread:$0]  %s101, 8192, %s103, [#allocation12], 256, 256, 16
    $region49: #{tpu_custom_call.1} parent=1 // pred_fallthru
      _
    // Predicated region
    $region50: #{tpu_custom_call.1} parent=1 // pred_check
      _
    $region51: #{tpu_custom_call.1} parent=1 // pred_check_branch
      %110 = sbr.rel (0) target = $region53
    $region52: #{tpu_custom_call.1} parent=1 // pred_region
      _
    $region53: #{tpu_custom_call.1} parent=1 // pred_fallthru
      _
    // Predicated region
    $region54: #{tpu_custom_call.1} parent=1 // pred_check
      _
    $region55: #{tpu_custom_call.1} parent=1 // pred_check_branch
      %112 = sbr.rel (0) target = $region57
    $region56: #{tpu_custom_call.1} parent=1 // pred_region
      %114 = vsyncadd [#allocation12], 0
      %s115 = sshll.u32 %s13, 4
      %s116 = int_to_ptr.hbm [resolvable:$true] %s115
      %s117 = sshll.u32 [#allocation13], 4
      %s118 = int_to_ptr.vmem [resolvable:$true] %s117
      %123 = dma.hbm_to_vmem [thread:$0]  %s116, 4096, %s118, [#allocation12], 64, 64, 4
    $region57: #{tpu_custom_call.1} parent=1 // pred_fallthru
      _
    // Predicated region
    $region58: #{tpu_custom_call.1} parent=1 // pred_check
      _
    $region59: #{tpu_custom_call.1} parent=1 // pred_check_branch
      %125 = sbr.rel (0) target = $region61
    $region60: #{tpu_custom_call.1} parent=1 // pred_region
      _
    $region61: #{tpu_custom_call.1} parent=1 // pred_fallthru
      _
    // Predicated region
    $region62: #{tpu_custom_call.1} parent=1 // pred_check
      _
    $region63: #{tpu_custom_call.1} parent=1 // pred_check_branch
      %127 = sbr.rel (0) target = $region65
    $region64: #{tpu_custom_call.1} parent=1 // pred_region
      %129 = dma.done [#allocation3], 4096
    $region65: #{tpu_custom_call.1} parent=1 // pred_fallthru
      _
    // Predicated region
    $region66: #{tpu_custom_call.1} parent=1 // pred_check
      _
    $region67: #{tpu_custom_call.1} parent=1 // pred_check_branch
      %131 = sbr.rel (0) target = $region69
    $region68: #{tpu_custom_call.1} parent=1 // pred_region
      %133 = dma.done [#allocation6], 16
    $region69: #{tpu_custom_call.1} parent=1 // pred_fallthru
      _
    // Predicated region
    $region70: #{tpu_custom_call.1} parent=1 // pred_check
      _
    $region71: #{tpu_custom_call.1} parent=1 // pred_check_branch
      %135 = sbr.rel (0) target = $region73
    $region72: #{tpu_custom_call.1} parent=1 // pred_region
      %137 = dma.done [#allocation6], 16
    $region73: #{tpu_custom_call.1} parent=1 // pred_fallthru
      _
    // Predicated region
    $region74: #{tpu_custom_call.1} parent=1 // pred_check
      _
    $region75: #{tpu_custom_call.1} parent=1 // pred_check_branch
      %139 = sbr.rel (0) target = $region77
    $region76: #{tpu_custom_call.1} parent=1 // pred_region
      %141 = dma.done [#allocation9], 16
    $region77: #{tpu_custom_call.1} parent=1 // pred_fallthru
      _
    // Predicated region
    $region78: #{tpu_custom_call.1} parent=1 // pred_check
      _
    $region79: #{tpu_custom_call.1} parent=1 // pred_check_branch
      %143 = sbr.rel (0) target = $region81
    $region80: #{tpu_custom_call.1} parent=1 // pred_region
      %145 = dma.done [#allocation9], 2048
    $region81: #{tpu_custom_call.1} parent=1 // pred_fallthru
      _
    // Predicated region
    $region82: #{tpu_custom_call.1} parent=1 // pred_check
      _
    $region83: #{tpu_custom_call.1} parent=1 // pred_check_branch
      %147 = sbr.rel (0) target = $region85
    $region84: #{tpu_custom_call.1} parent=1 // pred_region
      %149 = dma.done [#allocation12], 8192
    $region85: #{tpu_custom_call.1} parent=1 // pred_fallthru
      _
    // Predicated region
    $region86: #{tpu_custom_call.1} parent=1 // pred_check
      _
    $region87: #{tpu_custom_call.1} parent=1 // pred_check_branch
      %151 = sbr.rel (0) target = $region89
    $region88: #{tpu_custom_call.1} parent=1 // pred_region
      %153 = dma.done [#allocation12], 4096
    $region89: #{tpu_custom_call.1} parent=1 // pred_fallthru
      _
    %v155 = vld [vmem:[#allocation2] sm:$0xff]
    %v156 = vld [vmem:[#allocation2 + $0x8] sm:$0xff]
    %v157 = vld [vmem:[#allocation2 + $0x10] sm:$0xff]
    %v158 = vld [vmem:[#allocation2 + $0x18] sm:$0xff]
    %v159 = vld [vmem:[#allocation2 + $0x20] sm:$0xff]
    %v160 = vld [vmem:[#allocation2 + $0x28] sm:$0xff]
    %v161 = vld [vmem:[#allocation2 + $0x30] sm:$0xff]
    %v162 = vld [vmem:[#allocation2 + $0x38] sm:$0xff]
    %v163 = vld [vmem:[#allocation2 + $0x40] sm:$0xff]
    %v164 = vld [vmem:[#allocation2 + $0x48] sm:$0xff]
    %v165 = vld [vmem:[#allocation2 + $0x50] sm:$0xff]
    %v166 = vld [vmem:[#allocation2 + $0x58] sm:$0xff]
    %v167 = vld [vmem:[#allocation2 + $0x60] sm:$0xff]
    %v168 = vld [vmem:[#allocation2 + $0x68] sm:$0xff]
    %v169 = vld [vmem:[#allocation2 + $0x70] sm:$0xff]
    %v170 = vld [vmem:[#allocation2 + $0x78] sm:$0xff]
    %171 = vxpose.xlu0.b32.start [1/16] %v155, 128
    %172 = vxpose.xlu0.b32.cont [2/16] %v156, 128
    %173 = vxpose.xlu0.b32.cont [3/16] %v157, 128
    %174 = vxpose.xlu0.b32.cont [4/16] %v158, 128
    %175 = vxpose.xlu0.b32.cont [5/16] %v159, 128
    %176 = vxpose.xlu0.b32.cont [6/16] %v160, 128
    %177 = vxpose.xlu0.b32.cont [7/16] %v161, 128
    %178 = vxpose.xlu0.b32.cont [8/16] %v162, 128
    %179 = vxpose.xlu0.b32.cont [9/16] %v163, 128
    %180 = vxpose.xlu0.b32.cont [10/16] %v164, 128
    %181 = vxpose.xlu0.b32.cont [11/16] %v165, 128
    %182 = vxpose.xlu0.b32.cont [12/16] %v166, 128
    %183 = vxpose.xlu0.b32.cont [13/16] %v167, 128
    %184 = vxpose.xlu0.b32.cont [14/16] %v168, 128
    %185 = vxpose.xlu0.b32.cont [15/16] %v169, 128
    %186 = vxpose.xlu0.b32.end [16/16] %v170, 128
    %v187 = vpop.trf.xlu0
    %v188 = vpop.trf.xlu0
    %v189 = vpop.trf.xlu0
    %v190 = vpop.trf.xlu0
    %v191 = vpop.trf.xlu0
    %v192 = vpop.trf.xlu0
    %v193 = vpop.trf.xlu0
    %v194 = vpop.trf.xlu0
    %v195 = vpop.trf.xlu0
    %v196 = vpop.trf.xlu0
    %v197 = vpop.trf.xlu0
    %v198 = vpop.trf.xlu0
    %v199 = vpop.trf.xlu0
    %v200 = vpop.trf.xlu0
    %v201 = vpop.trf.xlu0
    %v202 = vpop.trf.xlu0
    %s203 = scalar_lea.vmem [#allocation2], 128
    %v204 = vld [vmem:[%s203] sm:$0xff]
    %v205 = vld [vmem:[%s203 + $0x8] sm:$0xff]
    %v206 = vld [vmem:[%s203 + $0x10] sm:$0xff]
    %v207 = vld [vmem:[%s203 + $0x18] sm:$0xff]
    %v208 = vld [vmem:[%s203 + $0x20] sm:$0xff]
    %v209 = vld [vmem:[%s203 + $0x28] sm:$0xff]
    %v210 = vld [vmem:[%s203 + $0x30] sm:$0xff]
    %v211 = vld [vmem:[%s203 + $0x38] sm:$0xff]
    %v212 = vld [vmem:[%s203 + $0x40] sm:$0xff]
    %v213 = vld [vmem:[%s203 + $0x48] sm:$0xff]
    %v214 = vld [vmem:[%s203 + $0x50] sm:$0xff]
    %v215 = vld [vmem:[%s203 + $0x58] sm:$0xff]
    %v216 = vld [vmem:[%s203 + $0x60] sm:$0xff]
    %v217 = vld [vmem:[%s203 + $0x68] sm:$0xff]
    %v218 = vld [vmem:[%s203 + $0x70] sm:$0xff]
    %v219 = vld [vmem:[%s203 + $0x78] sm:$0xff]
    %220 = vxpose.xlu0.b32.start [1/16] %v204, 128
    %221 = vxpose.xlu0.b32.cont [2/16] %v205, 128
    %222 = vxpose.xlu0.b32.cont [3/16] %v206, 128
    %223 = vxpose.xlu0.b32.cont [4/16] %v207, 128
    %224 = vxpose.xlu0.b32.cont [5/16] %v208, 128
    %225 = vxpose.xlu0.b32.cont [6/16] %v209, 128
    %226 = vxpose.xlu0.b32.cont [7/16] %v210, 128
    %227 = vxpose.xlu0.b32.cont [8/16] %v211, 128
    %228 = vxpose.xlu0.b32.cont [9/16] %v212, 128
    %229 = vxpose.xlu0.b32.cont [10/16] %v213, 128
    %230 = vxpose.xlu0.b32.cont [11/16] %v214, 128
    %231 = vxpose.xlu0.b32.cont [12/16] %v215, 128
    %232 = vxpose.xlu0.b32.cont [13/16] %v216, 128
    %233 = vxpose.xlu0.b32.cont [14/16] %v217, 128
    %234 = vxpose.xlu0.b32.cont [15/16] %v218, 128
    %235 = vxpose.xlu0.b32.end [16/16] %v219, 128
    %v236 = vpop.trf.xlu0
    %v237 = vpop.trf.xlu0
    %v238 = vpop.trf.xlu0
    %v239 = vpop.trf.xlu0
    %v240 = vpop.trf.xlu0
    %v241 = vpop.trf.xlu0
    %v242 = vpop.trf.xlu0
    %v243 = vpop.trf.xlu0
    %v244 = vpop.trf.xlu0
    %v245 = vpop.trf.xlu0
    %v246 = vpop.trf.xlu0
    %v247 = vpop.trf.xlu0
    %v248 = vpop.trf.xlu0
    %v249 = vpop.trf.xlu0
    %v250 = vpop.trf.xlu0
    %v251 = vpop.trf.xlu0
    %v252 = vpack.c.bf16 %v188, %v187
    %v253 = vpack.c.bf16 %v190, %v189
    %v254 = vpack.c.bf16 %v192, %v191
    %v255 = vpack.c.bf16 %v194, %v193
    %v256 = vpack.c.bf16 %v196, %v195
    %v257 = vpack.c.bf16 %v198, %v197
    %v258 = vpack.c.bf16 %v200, %v199
    %v259 = vpack.c.bf16 %v202, %v201
    %v260 = vpack.c.bf16 %v237, %v236
    %v261 = vpack.c.bf16 %v239, %v238
    %v262 = vpack.c.bf16 %v241, %v240
    %v263 = vpack.c.bf16 %v243, %v242
    %v264 = vpack.c.bf16 %v245, %v244
    %v265 = vpack.c.bf16 %v247, %v246
    %v266 = vpack.c.bf16 %v249, %v248
    %v267 = vpack.c.bf16 %v251, %v250
    %v268 = vld [vmem:[%s1] sm:$0xf]
    %v269 = vld [vmem:[%s1 + $0x4] sm:$0xf]
    %v270 = vld [vmem:[%s1 + $0x8] sm:$0xf]
    %v271 = vld [vmem:[%s1 + $0xc] sm:$0xf]
    %v272 = vld [vmem:[%s1 + $0x10] sm:$0xf]
    %v273 = vld [vmem:[%s1 + $0x14] sm:$0xf]
    %v274 = vld [vmem:[%s1 + $0x18] sm:$0xf]
    %v275 = vld [vmem:[%s1 + $0x1c] sm:$0xf]
    %v276 = vld [vmem:[%s1 + $0x20] sm:$0xf]
    %v277 = vld [vmem:[%s1 + $0x24] sm:$0xf]
    %v278 = vld [vmem:[%s1 + $0x28] sm:$0xf]
    %v279 = vld [vmem:[%s1 + $0x2c] sm:$0xf]
    %v280 = vld [vmem:[%s1 + $0x30] sm:$0xf]
    %v281 = vld [vmem:[%s1 + $0x34] sm:$0xf]
    %v282 = vld [vmem:[%s1 + $0x38] sm:$0xf]
    %v283 = vld [vmem:[%s1 + $0x3c] sm:$0xf]
    %v284 = vld [vmem:[%s2] sm:$0x1]
    %v286 = vperm.slane %v284, 0
    %v304 = vunpack.c.l.b16 %v268
    %v305 = vunpack.c.l.b16 %v269
    %v306 = vunpack.c.l.b16 %v270
    %v307 = vunpack.c.l.b16 %v271
    %v308 = vunpack.c.l.b16 %v272
    %v309 = vunpack.c.l.b16 %v273
    %v310 = vunpack.c.l.b16 %v274
    %v311 = vunpack.c.l.b16 %v275
    %v312 = vunpack.c.l.b16 %v276
    %v313 = vunpack.c.l.b16 %v277
    %v314 = vunpack.c.l.b16 %v278
    %v315 = vunpack.c.l.b16 %v279
    %v316 = vunpack.c.l.b16 %v280
    %v317 = vunpack.c.l.b16 %v281
    %v318 = vunpack.c.l.b16 %v282
    %v319 = vunpack.c.l.b16 %v283
    %v320 = vpack.c.b16 %v305, %v304
    %v321 = vpack.c.b16 %v307, %v306
    %v322 = vpack.c.b16 %v309, %v308
    %v323 = vpack.c.b16 %v311, %v310
    %v324 = vpack.c.b16 %v313, %v312
    %v325 = vpack.c.b16 %v315, %v314
    %v326 = vpack.c.b16 %v317, %v316
    %v327 = vpack.c.b16 %v319, %v318
    %336 = vmatpush.bf16.msra.mxu0 %v327
    %337 = vmatpush.bf16.msra.mxu0 %v326
    %338 = vmatpush.bf16.msra.mxu0 %v325
    %339 = vmatpush.bf16.msra.mxu0 %v324
    %340 = vmatpush.bf16.msra.mxu0 %v323
    %341 = vmatpush.bf16.msra.mxu0 %v322
    %342 = vmatpush.bf16.msra.mxu0 %v321
    %343 = vmatpush.bf16.msra.mxu0 %v320
    %344 = vmatmul.bf16.gmra.mxu0 %v252
    %v345 = vpop.f32.mrf.mxu0
    %v346 = vadd.f32 %v286, %v345
    %v347 = vpop.f32.mrf.mxu0
    %v348 = vadd.f32 %v286, %v347
    %349 = vmatmul.bf16.gmra.mxu0 %v253
    %v350 = vpop.f32.mrf.mxu0
    %v351 = vadd.f32 %v286, %v350
    %v352 = vpop.f32.mrf.mxu0
    %v353 = vadd.f32 %v286, %v352
    %354 = vmatmul.bf16.gmra.mxu0 %v254
    %v355 = vpop.f32.mrf.mxu0
    %v356 = vadd.f32 %v286, %v355
    %v357 = vpop.f32.mrf.mxu0
    %v358 = vadd.f32 %v286, %v357
    %359 = vmatmul.bf16.gmra.mxu0 %v255
    %v360 = vpop.f32.mrf.mxu0
    %v361 = vadd.f32 %v286, %v360
    %v362 = vpop.f32.mrf.mxu0
    %v363 = vadd.f32 %v286, %v362
    %364 = vmatmul.bf16.gmra.mxu0 %v256
    %v365 = vpop.f32.mrf.mxu0
    %v366 = vadd.f32 %v286, %v365
    %v367 = vpop.f32.mrf.mxu0
    %v368 = vadd.f32 %v286, %v367
    %369 = vmatmul.bf16.gmra.mxu0 %v257
    %v370 = vpop.f32.mrf.mxu0
    %v371 = vadd.f32 %v286, %v370
    %v372 = vpop.f32.mrf.mxu0
    %v373 = vadd.f32 %v286, %v372
    %374 = vmatmul.bf16.gmra.mxu0 %v258
    %v375 = vpop.f32.mrf.mxu0
    %v376 = vadd.f32 %v286, %v375
    %v377 = vpop.f32.mrf.mxu0
    %v378 = vadd.f32 %v286, %v377
    %379 = vmatmul.bf16.gmra.mxu0 %v259
    %v380 = vpop.f32.mrf.mxu0
    %v381 = vadd.f32 %v286, %v380
    %v382 = vpop.f32.mrf.mxu0
    %v383 = vadd.f32 %v286, %v382
    %384 = vmatmul.bf16.gmra.mxu0 %v260
    %v385 = vpop.f32.mrf.mxu0
    %v386 = vadd.f32 %v286, %v385
    %v387 = vpop.f32.mrf.mxu0
    %v388 = vadd.f32 %v286, %v387
    %389 = vmatmul.bf16.gmra.mxu0 %v261
    %v390 = vpop.f32.mrf.mxu0
    %v391 = vadd.f32 %v286, %v390
    %v392 = vpop.f32.mrf.mxu0
    %v393 = vadd.f32 %v286, %v392
    %394 = vmatmul.bf16.gmra.mxu0 %v262
    %v395 = vpop.f32.mrf.mxu0
    %v396 = vadd.f32 %v286, %v395
    %v397 = vpop.f32.mrf.mxu0
    %v398 = vadd.f32 %v286, %v397
    %399 = vmatmul.bf16.gmra.mxu0 %v263
    %v400 = vpop.f32.mrf.mxu0
    %v401 = vadd.f32 %v286, %v400
    %v402 = vpop.f32.mrf.mxu0
    %v403 = vadd.f32 %v286, %v402
    %404 = vmatmul.bf16.gmra.mxu0 %v264
    %v405 = vpop.f32.mrf.mxu0
    %v406 = vadd.f32 %v286, %v405
    %v407 = vpop.f32.mrf.mxu0
    %v408 = vadd.f32 %v286, %v407
    %409 = vmatmul.bf16.gmra.mxu0 %v265
    %v410 = vpop.f32.mrf.mxu0
    %v411 = vadd.f32 %v286, %v410
    %v412 = vpop.f32.mrf.mxu0
    %v413 = vadd.f32 %v286, %v412
    %414 = vmatmul.bf16.gmra.mxu0 %v266
    %v415 = vpop.f32.mrf.mxu0
    %v416 = vadd.f32 %v286, %v415
    %v417 = vpop.f32.mrf.mxu0
    %v418 = vadd.f32 %v286, %v417
    %419 = vmatmul.bf16.gmra.mxu0 %v267
    %v420 = vpop.f32.mrf.mxu0
    %v421 = vadd.f32 %v286, %v420
    %v422 = vpop.f32.mrf.mxu0
    %v423 = vadd.f32 %v286, %v422
    %424 = vdwg.mxu0
    %v425 = vmax.f32 %v346, 0.0
    %v426 = vmax.f32 %v348, 0.0
    %v427 = vmax.f32 %v351, 0.0
    %v428 = vmax.f32 %v353, 0.0
    %v429 = vmax.f32 %v356, 0.0
    %v430 = vmax.f32 %v358, 0.0
    %v431 = vmax.f32 %v361, 0.0
    %v432 = vmax.f32 %v363, 0.0
    %v433 = vmax.f32 %v366, 0.0
    %v434 = vmax.f32 %v368, 0.0
    %v435 = vmax.f32 %v371, 0.0
    %v436 = vmax.f32 %v373, 0.0
    %v437 = vmax.f32 %v376, 0.0
    %v438 = vmax.f32 %v378, 0.0
    %v439 = vmax.f32 %v381, 0.0
    %v440 = vmax.f32 %v383, 0.0
    %v441 = vmax.f32 %v386, 0.0
    %v442 = vmax.f32 %v388, 0.0
    %v443 = vmax.f32 %v391, 0.0
    %v444 = vmax.f32 %v393, 0.0
    %v445 = vmax.f32 %v396, 0.0
    %v446 = vmax.f32 %v398, 0.0
    %v447 = vmax.f32 %v401, 0.0
    %v448 = vmax.f32 %v403, 0.0
    %v449 = vmax.f32 %v406, 0.0
    %v450 = vmax.f32 %v408, 0.0
    %v451 = vmax.f32 %v411, 0.0
    %v452 = vmax.f32 %v413, 0.0
    %v453 = vmax.f32 %v416, 0.0
    %v454 = vmax.f32 %v418, 0.0
    %v455 = vmax.f32 %v421, 0.0
    %v456 = vmax.f32 %v423, 0.0
    %v457 = vpack.c.bf16 %v426, %v425
    %v458 = vpack.c.bf16 %v428, %v427
    %v459 = vpack.c.bf16 %v430, %v429
    %v460 = vpack.c.bf16 %v432, %v431
    %v461 = vpack.c.bf16 %v434, %v433
    %v462 = vpack.c.bf16 %v436, %v435
    %v463 = vpack.c.bf16 %v438, %v437
    %v464 = vpack.c.bf16 %v440, %v439
    %v465 = vpack.c.bf16 %v442, %v441
    %v466 = vpack.c.bf16 %v444, %v443
    %v467 = vpack.c.bf16 %v446, %v445
    %v468 = vpack.c.bf16 %v448, %v447
    %v469 = vpack.c.bf16 %v450, %v449
    %v470 = vpack.c.bf16 %v452, %v451
    %v471 = vpack.c.bf16 %v454, %v453
    %v472 = vpack.c.bf16 %v456, %v455
    %v473 = vld [vmem:[%s3] sm:$0xf]
    %v474 = vld [vmem:[%s3 + $0x4] sm:$0xf]
    %v475 = vld [vmem:[%s3 + $0x8] sm:$0xf]
    %v476 = vld [vmem:[%s3 + $0xc] sm:$0xf]
    %v477 = vld [vmem:[%s3 + $0x10] sm:$0xf]
    %v478 = vld [vmem:[%s3 + $0x14] sm:$0xf]
    %v479 = vld [vmem:[%s3 + $0x18] sm:$0xf]
    %v480 = vld [vmem:[%s3 + $0x1c] sm:$0xf]
    %v481 = vld [vmem:[#allocation5] sm:$0x1]
    %v483 = vperm.slane %v481, 0
    %v493 = vunpack.c.l.b16 %v473
    %v494 = vunpack.c.l.b16 %v474
    %v495 = vunpack.c.l.b16 %v475
    %v496 = vunpack.c.l.b16 %v476
    %v497 = vunpack.c.l.b16 %v477
    %v498 = vunpack.c.l.b16 %v478
    %v499 = vunpack.c.l.b16 %v479
    %v500 = vunpack.c.l.b16 %v480
    %v501 = vpack.c.b16 %v494, %v493
    %v502 = vpack.c.b16 %v496, %v495
    %v503 = vpack.c.b16 %v498, %v497
    %v504 = vpack.c.b16 %v500, %v499
    %vm509 = vcmask 523264
    %v511 = vsel %vm509, %v457, 0
    %v514 = vsel %vm509, %v458, 0
    %v517 = vsel %vm509, %v459, 0
    %v520 = vsel %vm509, %v460, 0
    %v523 = vsel %vm509, %v461, 0
    %v526 = vsel %vm509, %v462, 0
    %v529 = vsel %vm509, %v463, 0
    %v532 = vsel %vm509, %v464, 0
    %v535 = vsel %vm509, %v465, 0
    %v538 = vsel %vm509, %v466, 0
    %v541 = vsel %vm509, %v467, 0
    %v544 = vsel %vm509, %v468, 0
    %v547 = vsel %vm509, %v469, 0
    %v550 = vsel %vm509, %v470, 0
    %v553 = vsel %vm509, %v471, 0
    %v556 = vsel %vm509, %v472, 0
    %558 = vmatpush.bf16.msra.mxu0 0
    %559 = vmatpush.bf16.msra.mxu0 0
    %560 = vmatpush.bf16.msra.mxu0 0
    %561 = vmatpush.bf16.msra.mxu0 0
    %562 = vmatpush.bf16.msra.mxu0 %v504
    %563 = vmatpush.bf16.msra.mxu0 %v503
    %564 = vmatpush.bf16.msra.mxu0 %v502
    %565 = vmatpush.bf16.msra.mxu0 %v501
    %566 = vmatmul.bf16.gmra.mxu0 %v511
    %v567 = vpop.f32.mrf.mxu0
    %v568 = vadd.f32 %v483, %v567
    %v569 = vpop.f32.mrf.mxu0
    %v570 = vadd.f32 %v483, %v569
    %571 = vmatmul.bf16.gmra.mxu0 %v514
    %v572 = vpop.f32.mrf.mxu0
    %v573 = vadd.f32 %v483, %v572
    %v574 = vpop.f32.mrf.mxu0
    %v575 = vadd.f32 %v483, %v574
    %576 = vmatmul.bf16.gmra.mxu0 %v517
    %v577 = vpop.f32.mrf.mxu0
    %v578 = vadd.f32 %v483, %v577
    %v579 = vpop.f32.mrf.mxu0
    %v580 = vadd.f32 %v483, %v579
    %581 = vmatmul.bf16.gmra.mxu0 %v520
    %v582 = vpop.f32.mrf.mxu0
    %v583 = vadd.f32 %v483, %v582
    %v584 = vpop.f32.mrf.mxu0
    %v585 = vadd.f32 %v483, %v584
    %586 = vmatmul.bf16.gmra.mxu0 %v523
    %v587 = vpop.f32.mrf.mxu0
    %v588 = vadd.f32 %v483, %v587
    %v589 = vpop.f32.mrf.mxu0
    %v590 = vadd.f32 %v483, %v589
    %591 = vmatmul.bf16.gmra.mxu0 %v526
    %v592 = vpop.f32.mrf.mxu0
    %v593 = vadd.f32 %v483, %v592
    %v594 = vpop.f32.mrf.mxu0
    %v595 = vadd.f32 %v483, %v594
    %596 = vmatmul.bf16.gmra.mxu0 %v529
    %v597 = vpop.f32.mrf.mxu0
    %v598 = vadd.f32 %v483, %v597
    %v599 = vpop.f32.mrf.mxu0
    %v600 = vadd.f32 %v483, %v599
    %601 = vmatmul.bf16.gmra.mxu0 %v532
    %v602 = vpop.f32.mrf.mxu0
    %v603 = vadd.f32 %v483, %v602
    %v604 = vpop.f32.mrf.mxu0
    %v605 = vadd.f32 %v483, %v604
    %606 = vmatmul.bf16.gmra.mxu0 %v535
    %v607 = vpop.f32.mrf.mxu0
    %v608 = vadd.f32 %v483, %v607
    %v609 = vpop.f32.mrf.mxu0
    %v610 = vadd.f32 %v483, %v609
    %611 = vmatmul.bf16.gmra.mxu0 %v538
    %v612 = vpop.f32.mrf.mxu0
    %v613 = vadd.f32 %v483, %v612
    %v614 = vpop.f32.mrf.mxu0
    %v615 = vadd.f32 %v483, %v614
    %616 = vmatmul.bf16.gmra.mxu0 %v541
    %v617 = vpop.f32.mrf.mxu0
    %v618 = vadd.f32 %v483, %v617
    %v619 = vpop.f32.mrf.mxu0
    %v620 = vadd.f32 %v483, %v619
    %621 = vmatmul.bf16.gmra.mxu0 %v544
    %v622 = vpop.f32.mrf.mxu0
    %v623 = vadd.f32 %v483, %v622
    %v624 = vpop.f32.mrf.mxu0
    %v625 = vadd.f32 %v483, %v624
    %626 = vmatmul.bf16.gmra.mxu0 %v547
    %v627 = vpop.f32.mrf.mxu0
    %v628 = vadd.f32 %v483, %v627
    %v629 = vpop.f32.mrf.mxu0
    %v630 = vadd.f32 %v483, %v629
    %631 = vmatmul.bf16.gmra.mxu0 %v550
    %v632 = vpop.f32.mrf.mxu0
    %v633 = vadd.f32 %v483, %v632
    %v634 = vpop.f32.mrf.mxu0
    %v635 = vadd.f32 %v483, %v634
    %636 = vmatmul.bf16.gmra.mxu0 %v553
    %v637 = vpop.f32.mrf.mxu0
    %v638 = vadd.f32 %v483, %v637
    %v639 = vpop.f32.mrf.mxu0
    %v640 = vadd.f32 %v483, %v639
    %641 = vmatmul.bf16.gmra.mxu0 %v556
    %v642 = vpop.f32.mrf.mxu0
    %v643 = vadd.f32 %v483, %v642
    %v644 = vpop.f32.mrf.mxu0
    %v645 = vadd.f32 %v483, %v644
    %646 = vdwg.mxu0
    %v647 = vmax.f32 %v568, 0.0
    %v648 = vmax.f32 %v570, 0.0
    %v649 = vmax.f32 %v573, 0.0
    %v650 = vmax.f32 %v575, 0.0
    %v651 = vmax.f32 %v578, 0.0
    %v652 = vmax.f32 %v580, 0.0
    %v653 = vmax.f32 %v583, 0.0
    %v654 = vmax.f32 %v585, 0.0
    %v655 = vmax.f32 %v588, 0.0
    %v656 = vmax.f32 %v590, 0.0
    %v657 = vmax.f32 %v593, 0.0
    %v658 = vmax.f32 %v595, 0.0
    %v659 = vmax.f32 %v598, 0.0
    %v660 = vmax.f32 %v600, 0.0
    %v661 = vmax.f32 %v603, 0.0
    %v662 = vmax.f32 %v605, 0.0
    %v663 = vmax.f32 %v608, 0.0
    %v664 = vmax.f32 %v610, 0.0
    %v665 = vmax.f32 %v613, 0.0
    %v666 = vmax.f32 %v615, 0.0
    %v667 = vmax.f32 %v618, 0.0
    %v668 = vmax.f32 %v620, 0.0
    %v669 = vmax.f32 %v623, 0.0
    %v670 = vmax.f32 %v625, 0.0
    %v671 = vmax.f32 %v628, 0.0
    %v672 = vmax.f32 %v630, 0.0
    %v673 = vmax.f32 %v633, 0.0
    %v674 = vmax.f32 %v635, 0.0
    %v675 = vmax.f32 %v638, 0.0
    %v676 = vmax.f32 %v640, 0.0
    %v677 = vmax.f32 %v643, 0.0
    %v678 = vmax.f32 %v645, 0.0
    %v679 = vpack.c.bf16 %v648, %v647
    %v680 = vpack.c.bf16 %v650, %v649
    %v681 = vpack.c.bf16 %v652, %v651
    %v682 = vpack.c.bf16 %v654, %v653
    %v683 = vpack.c.bf16 %v656, %v655
    %v684 = vpack.c.bf16 %v658, %v657
    %v685 = vpack.c.bf16 %v660, %v659
    %v686 = vpack.c.bf16 %v662, %v661
    %v687 = vpack.c.bf16 %v664, %v663
    %v688 = vpack.c.bf16 %v666, %v665
    %v689 = vpack.c.bf16 %v668, %v667
    %v690 = vpack.c.bf16 %v670, %v669
    %v691 = vpack.c.bf16 %v672, %v671
    %v692 = vpack.c.bf16 %v674, %v673
    %v693 = vpack.c.bf16 %v676, %v675
    %v694 = vpack.c.bf16 %v678, %v677
    %v695 = vld [vmem:[%s5] sm:$0xf]
    %v696 = vld [vmem:[%s5 + $0x4] sm:$0xf]
    %v697 = vld [vmem:[%s5 + $0x8] sm:$0xf]
    %v698 = vld [vmem:[%s5 + $0xc] sm:$0xf]
    %v699 = vld [vmem:[%s5 + $0x10] sm:$0xf]
    %v700 = vld [vmem:[%s5 + $0x14] sm:$0xf]
    %v701 = vld [vmem:[%s5 + $0x18] sm:$0xf]
    %v702 = vld [vmem:[%s5 + $0x1c] sm:$0xf]
    %v703 = vld [vmem:[#allocation7] sm:$0x1]
    %v705 = vperm.slane %v703, 0
    %v715 = vunpack.c.l.b16 %v695
    %v716 = vunpack.c.l.b16 %v696
    %v717 = vunpack.c.l.b16 %v697
    %v718 = vunpack.c.l.b16 %v698
    %v719 = vunpack.c.l.b16 %v699
    %v720 = vunpack.c.l.b16 %v700
    %v721 = vunpack.c.l.b16 %v701
    %v722 = vunpack.c.l.b16 %v702
    %v723 = vpack.c.b16 %v716, %v715
    %v724 = vpack.c.b16 %v718, %v717
    %v725 = vpack.c.b16 %v720, %v719
    %v726 = vpack.c.b16 %v722, %v721
    %v732 = vsel %vm509, %v679, 0
    %v735 = vsel %vm509, %v680, 0
    %v738 = vsel %vm509, %v681, 0
    %v741 = vsel %vm509, %v682, 0
    %v744 = vsel %vm509, %v683, 0
    %v747 = vsel %vm509, %v684, 0
    %v750 = vsel %vm509, %v685, 0
    %v753 = vsel %vm509, %v686, 0
    %v756 = vsel %vm509, %v687, 0
    %v759 = vsel %vm509, %v688, 0
    %v762 = vsel %vm509, %v689, 0
    %v765 = vsel %vm509, %v690, 0
    %v768 = vsel %vm509, %v691, 0
    %v771 = vsel %vm509, %v692, 0
    %v774 = vsel %vm509, %v693, 0
    %v777 = vsel %vm509, %v694, 0
    %779 = vmatpush.bf16.msra.mxu0 0
    %780 = vmatpush.bf16.msra.mxu0 0
    %781 = vmatpush.bf16.msra.mxu0 0
    %782 = vmatpush.bf16.msra.mxu0 0
    %783 = vmatpush.bf16.msra.mxu0 %v726
    %784 = vmatpush.bf16.msra.mxu0 %v725
    %785 = vmatpush.bf16.msra.mxu0 %v724
    %786 = vmatpush.bf16.msra.mxu0 %v723
    %787 = vmatmul.bf16.gmra.mxu0 %v732
    %v788 = vpop.f32.mrf.mxu0
    %v789 = vadd.f32 %v705, %v788
    %v790 = vpop.f32.mrf.mxu0
    %v791 = vadd.f32 %v705, %v790
    %792 = vmatmul.bf16.gmra.mxu0 %v735
    %v793 = vpop.f32.mrf.mxu0
    %v794 = vadd.f32 %v705, %v793
    %v795 = vpop.f32.mrf.mxu0
    %v796 = vadd.f32 %v705, %v795
    %797 = vmatmul.bf16.gmra.mxu0 %v738
    %v798 = vpop.f32.mrf.mxu0
    %v799 = vadd.f32 %v705, %v798
    %v800 = vpop.f32.mrf.mxu0
    %v801 = vadd.f32 %v705, %v800
    %802 = vmatmul.bf16.gmra.mxu0 %v741
    %v803 = vpop.f32.mrf.mxu0
    %v804 = vadd.f32 %v705, %v803
    %v805 = vpop.f32.mrf.mxu0
    %v806 = vadd.f32 %v705, %v805
    %807 = vmatmul.bf16.gmra.mxu0 %v744
    %v808 = vpop.f32.mrf.mxu0
    %v809 = vadd.f32 %v705, %v808
    %v810 = vpop.f32.mrf.mxu0
    %v811 = vadd.f32 %v705, %v810
    %812 = vmatmul.bf16.gmra.mxu0 %v747
    %v813 = vpop.f32.mrf.mxu0
    %v814 = vadd.f32 %v705, %v813
    %v815 = vpop.f32.mrf.mxu0
    %v816 = vadd.f32 %v705, %v815
    %817 = vmatmul.bf16.gmra.mxu0 %v750
    %v818 = vpop.f32.mrf.mxu0
    %v819 = vadd.f32 %v705, %v818
    %v820 = vpop.f32.mrf.mxu0
    %v821 = vadd.f32 %v705, %v820
    %822 = vmatmul.bf16.gmra.mxu0 %v753
    %v823 = vpop.f32.mrf.mxu0
    %v824 = vadd.f32 %v705, %v823
    %v825 = vpop.f32.mrf.mxu0
    %v826 = vadd.f32 %v705, %v825
    %827 = vmatmul.bf16.gmra.mxu0 %v756
    %v828 = vpop.f32.mrf.mxu0
    %v829 = vadd.f32 %v705, %v828
    %v830 = vpop.f32.mrf.mxu0
    %v831 = vadd.f32 %v705, %v830
    %832 = vmatmul.bf16.gmra.mxu0 %v759
    %v833 = vpop.f32.mrf.mxu0
    %v834 = vadd.f32 %v705, %v833
    %v835 = vpop.f32.mrf.mxu0
    %v836 = vadd.f32 %v705, %v835
    %837 = vmatmul.bf16.gmra.mxu0 %v762
    %v838 = vpop.f32.mrf.mxu0
    %v839 = vadd.f32 %v705, %v838
    %v840 = vpop.f32.mrf.mxu0
    %v841 = vadd.f32 %v705, %v840
    %842 = vmatmul.bf16.gmra.mxu0 %v765
    %v843 = vpop.f32.mrf.mxu0
    %v844 = vadd.f32 %v705, %v843
    %v845 = vpop.f32.mrf.mxu0
    %v846 = vadd.f32 %v705, %v845
    %847 = vmatmul.bf16.gmra.mxu0 %v768
    %v848 = vpop.f32.mrf.mxu0
    %v849 = vadd.f32 %v705, %v848
    %v850 = vpop.f32.mrf.mxu0
    %v851 = vadd.f32 %v705, %v850
    %852 = vmatmul.bf16.gmra.mxu0 %v771
    %v853 = vpop.f32.mrf.mxu0
    %v854 = vadd.f32 %v705, %v853
    %v855 = vpop.f32.mrf.mxu0
    %v856 = vadd.f32 %v705, %v855
    %857 = vmatmul.bf16.gmra.mxu0 %v774
    %v858 = vpop.f32.mrf.mxu0
    %v859 = vadd.f32 %v705, %v858
    %v860 = vpop.f32.mrf.mxu0
    %v861 = vadd.f32 %v705, %v860
    %862 = vmatmul.bf16.gmra.mxu0 %v777
    %v863 = vpop.f32.mrf.mxu0
    %v864 = vadd.f32 %v705, %v863
    %v865 = vpop.f32.mrf.mxu0
    %v866 = vadd.f32 %v705, %v865
    %867 = vdwg.mxu0
    %v868 = vmax.f32 %v789, 0.0
    %v869 = vmax.f32 %v791, 0.0
    %v870 = vmax.f32 %v794, 0.0
    %v871 = vmax.f32 %v796, 0.0
    %v872 = vmax.f32 %v799, 0.0
    %v873 = vmax.f32 %v801, 0.0
    %v874 = vmax.f32 %v804, 0.0
    %v875 = vmax.f32 %v806, 0.0
    %v876 = vmax.f32 %v809, 0.0
    %v877 = vmax.f32 %v811, 0.0
    %v878 = vmax.f32 %v814, 0.0
    %v879 = vmax.f32 %v816, 0.0
    %v880 = vmax.f32 %v819, 0.0
    %v881 = vmax.f32 %v821, 0.0
    %v882 = vmax.f32 %v824, 0.0
    %v883 = vmax.f32 %v826, 0.0
    %v884 = vmax.f32 %v829, 0.0
    %v885 = vmax.f32 %v831, 0.0
    %v886 = vmax.f32 %v834, 0.0
    %v887 = vmax.f32 %v836, 0.0
    %v888 = vmax.f32 %v839, 0.0
    %v889 = vmax.f32 %v841, 0.0
    %v890 = vmax.f32 %v844, 0.0
    %v891 = vmax.f32 %v846, 0.0
    %v892 = vmax.f32 %v849, 0.0
    %v893 = vmax.f32 %v851, 0.0
    %v894 = vmax.f32 %v854, 0.0
    %v895 = vmax.f32 %v856, 0.0
    %v896 = vmax.f32 %v859, 0.0
    %v897 = vmax.f32 %v861, 0.0
    %v898 = vmax.f32 %v864, 0.0
    %v899 = vmax.f32 %v866, 0.0
    %v900 = vpack.c.bf16 %v869, %v868
    %v901 = vpack.c.bf16 %v871, %v870
    %v902 = vpack.c.bf16 %v873, %v872
    %v903 = vpack.c.bf16 %v875, %v874
    %v904 = vpack.c.bf16 %v877, %v876
    %v905 = vpack.c.bf16 %v879, %v878
    %v906 = vpack.c.bf16 %v881, %v880
    %v907 = vpack.c.bf16 %v883, %v882
    %v908 = vpack.c.bf16 %v885, %v884
    %v909 = vpack.c.bf16 %v887, %v886
    %v910 = vpack.c.bf16 %v889, %v888
    %v911 = vpack.c.bf16 %v891, %v890
    %v912 = vpack.c.bf16 %v893, %v892
    %v913 = vpack.c.bf16 %v895, %v894
    %v914 = vpack.c.bf16 %v897, %v896
    %v915 = vpack.c.bf16 %v899, %v898
    %v916 = vld [vmem:[%s7] sm:$0xf]
    %v917 = vld [vmem:[%s7 + $0x4] sm:$0xf]
    %v918 = vld [vmem:[%s7 + $0x8] sm:$0xf]
    %v919 = vld [vmem:[%s7 + $0xc] sm:$0xf]
    %v920 = vld [vmem:[%s7 + $0x10] sm:$0xf]
    %v921 = vld [vmem:[%s7 + $0x14] sm:$0xf]
    %v922 = vld [vmem:[%s7 + $0x18] sm:$0xf]
    %v923 = vld [vmem:[%s7 + $0x1c] sm:$0xf]
    %v924 = vld [vmem:[#allocation8] sm:$0x1]
    %v926 = vperm.slane %v924, 0
    %v936 = vunpack.c.l.b16 %v916
    %v937 = vunpack.c.l.b16 %v917
    %v938 = vunpack.c.l.b16 %v918
    %v939 = vunpack.c.l.b16 %v919
    %v940 = vunpack.c.l.b16 %v920
    %v941 = vunpack.c.l.b16 %v921
    %v942 = vunpack.c.l.b16 %v922
    %v943 = vunpack.c.l.b16 %v923
    %v944 = vpack.c.b16 %v937, %v936
    %v945 = vpack.c.b16 %v939, %v938
    %v946 = vpack.c.b16 %v941, %v940
    %v947 = vpack.c.b16 %v943, %v942
    %v953 = vsel %vm509, %v900, 0
    %v956 = vsel %vm509, %v901, 0
    %v959 = vsel %vm509, %v902, 0
    %v962 = vsel %vm509, %v903, 0
    %v965 = vsel %vm509, %v904, 0
    %v968 = vsel %vm509, %v905, 0
    %v971 = vsel %vm509, %v906, 0
    %v974 = vsel %vm509, %v907, 0
    %v977 = vsel %vm509, %v908, 0
    %v980 = vsel %vm509, %v909, 0
    %v983 = vsel %vm509, %v910, 0
    %v986 = vsel %vm509, %v911, 0
    %v989 = vsel %vm509, %v912, 0
    %v992 = vsel %vm509, %v913, 0
    %v995 = vsel %vm509, %v914, 0
    %v998 = vsel %vm509, %v915, 0
    %1000 = vmatpush.bf16.msra.mxu0 0
    %1001 = vmatpush.bf16.msra.mxu0 0
    %1002 = vmatpush.bf16.msra.mxu0 0
    %1003 = vmatpush.bf16.msra.mxu0 0
    %1004 = vmatpush.bf16.msra.mxu0 %v947
    %1005 = vmatpush.bf16.msra.mxu0 %v946
    %1006 = vmatpush.bf16.msra.mxu0 %v945
    %1007 = vmatpush.bf16.msra.mxu0 %v944
    %1008 = vmatmul.bf16.gmra.mxu0 %v953
    %v1009 = vpop.f32.mrf.mxu0
    %v1010 = vadd.f32 %v926, %v1009
    %v1011 = vpop.f32.mrf.mxu0
    %v1012 = vadd.f32 %v926, %v1011
    %1013 = vmatmul.bf16.gmra.mxu0 %v956
    %v1014 = vpop.f32.mrf.mxu0
    %v1015 = vadd.f32 %v926, %v1014
    %v1016 = vpop.f32.mrf.mxu0
    %v1017 = vadd.f32 %v926, %v1016
    %1018 = vmatmul.bf16.gmra.mxu0 %v959
    %v1019 = vpop.f32.mrf.mxu0
    %v1020 = vadd.f32 %v926, %v1019
    %v1021 = vpop.f32.mrf.mxu0
    %v1022 = vadd.f32 %v926, %v1021
    %1023 = vmatmul.bf16.gmra.mxu0 %v962
    %v1024 = vpop.f32.mrf.mxu0
    %v1025 = vadd.f32 %v926, %v1024
    %v1026 = vpop.f32.mrf.mxu0
    %v1027 = vadd.f32 %v926, %v1026
    %1028 = vmatmul.bf16.gmra.mxu0 %v965
    %v1029 = vpop.f32.mrf.mxu0
    %v1030 = vadd.f32 %v926, %v1029
    %v1031 = vpop.f32.mrf.mxu0
    %v1032 = vadd.f32 %v926, %v1031
    %1033 = vmatmul.bf16.gmra.mxu0 %v968
    %v1034 = vpop.f32.mrf.mxu0
    %v1035 = vadd.f32 %v926, %v1034
    %v1036 = vpop.f32.mrf.mxu0
    %v1037 = vadd.f32 %v926, %v1036
    %1038 = vmatmul.bf16.gmra.mxu0 %v971
    %v1039 = vpop.f32.mrf.mxu0
    %v1040 = vadd.f32 %v926, %v1039
    %v1041 = vpop.f32.mrf.mxu0
    %v1042 = vadd.f32 %v926, %v1041
    %1043 = vmatmul.bf16.gmra.mxu0 %v974
    %v1044 = vpop.f32.mrf.mxu0
    %v1045 = vadd.f32 %v926, %v1044
    %v1046 = vpop.f32.mrf.mxu0
    %v1047 = vadd.f32 %v926, %v1046
    %1048 = vmatmul.bf16.gmra.mxu0 %v977
    %v1049 = vpop.f32.mrf.mxu0
    %v1050 = vadd.f32 %v926, %v1049
    %v1051 = vpop.f32.mrf.mxu0
    %v1052 = vadd.f32 %v926, %v1051
    %1053 = vmatmul.bf16.gmra.mxu0 %v980
    %v1054 = vpop.f32.mrf.mxu0
    %v1055 = vadd.f32 %v926, %v1054
    %v1056 = vpop.f32.mrf.mxu0
    %v1057 = vadd.f32 %v926, %v1056
    %1058 = vmatmul.bf16.gmra.mxu0 %v983
    %v1059 = vpop.f32.mrf.mxu0
    %v1060 = vadd.f32 %v926, %v1059
    %v1061 = vpop.f32.mrf.mxu0
    %v1062 = vadd.f32 %v926, %v1061
    %1063 = vmatmul.bf16.gmra.mxu0 %v986
    %v1064 = vpop.f32.mrf.mxu0
    %v1065 = vadd.f32 %v926, %v1064
    %v1066 = vpop.f32.mrf.mxu0
    %v1067 = vadd.f32 %v926, %v1066
    %1068 = vmatmul.bf16.gmra.mxu0 %v989
    %v1069 = vpop.f32.mrf.mxu0
    %v1070 = vadd.f32 %v926, %v1069
    %v1071 = vpop.f32.mrf.mxu0
    %v1072 = vadd.f32 %v926, %v1071
    %1073 = vmatmul.bf16.gmra.mxu0 %v992
    %v1074 = vpop.f32.mrf.mxu0
    %v1075 = vadd.f32 %v926, %v1074
    %v1076 = vpop.f32.mrf.mxu0
    %v1077 = vadd.f32 %v926, %v1076
    %1078 = vmatmul.bf16.gmra.mxu0 %v995
    %v1079 = vpop.f32.mrf.mxu0
    %v1080 = vadd.f32 %v926, %v1079
    %v1081 = vpop.f32.mrf.mxu0
    %v1082 = vadd.f32 %v926, %v1081
    %1083 = vmatmul.bf16.gmra.mxu0 %v998
    %v1084 = vpop.f32.mrf.mxu0
    %v1085 = vadd.f32 %v926, %v1084
    %v1086 = vpop.f32.mrf.mxu0
    %v1087 = vadd.f32 %v926, %v1086
    %1088 = vdwg.mxu0
    %v1089 = vmax.f32 %v1010, 0.0
    %v1090 = vmax.f32 %v1012, 0.0
    %v1091 = vmax.f32 %v1015, 0.0
    %v1092 = vmax.f32 %v1017, 0.0
    %v1093 = vmax.f32 %v1020, 0.0
    %v1094 = vmax.f32 %v1022, 0.0
    %v1095 = vmax.f32 %v1025, 0.0
    %v1096 = vmax.f32 %v1027, 0.0
    %v1097 = vmax.f32 %v1030, 0.0
    %v1098 = vmax.f32 %v1032, 0.0
    %v1099 = vmax.f32 %v1035, 0.0
    %v1100 = vmax.f32 %v1037, 0.0
    %v1101 = vmax.f32 %v1040, 0.0
    %v1102 = vmax.f32 %v1042, 0.0
    %v1103 = vmax.f32 %v1045, 0.0
    %v1104 = vmax.f32 %v1047, 0.0
    %v1105 = vmax.f32 %v1050, 0.0
    %v1106 = vmax.f32 %v1052, 0.0
    %v1107 = vmax.f32 %v1055, 0.0
    %v1108 = vmax.f32 %v1057, 0.0
    %v1109 = vmax.f32 %v1060, 0.0
    %v1110 = vmax.f32 %v1062, 0.0
    %v1111 = vmax.f32 %v1065, 0.0
    %v1112 = vmax.f32 %v1067, 0.0
    %v1113 = vmax.f32 %v1070, 0.0
    %v1114 = vmax.f32 %v1072, 0.0
    %v1115 = vmax.f32 %v1075, 0.0
    %v1116 = vmax.f32 %v1077, 0.0
    %v1117 = vmax.f32 %v1080, 0.0
    %v1118 = vmax.f32 %v1082, 0.0
    %v1119 = vmax.f32 %v1085, 0.0
    %v1120 = vmax.f32 %v1087, 0.0
    %v1121 = vpack.c.bf16 %v1090, %v1089
    %v1122 = vpack.c.bf16 %v1092, %v1091
    %v1123 = vpack.c.bf16 %v1094, %v1093
    %v1124 = vpack.c.bf16 %v1096, %v1095
    %v1125 = vpack.c.bf16 %v1098, %v1097
    %v1126 = vpack.c.bf16 %v1100, %v1099
    %v1127 = vpack.c.bf16 %v1102, %v1101
    %v1128 = vpack.c.bf16 %v1104, %v1103
    %v1129 = vpack.c.bf16 %v1106, %v1105
    %v1130 = vpack.c.bf16 %v1108, %v1107
    %v1131 = vpack.c.bf16 %v1110, %v1109
    %v1132 = vpack.c.bf16 %v1112, %v1111
    %v1133 = vpack.c.bf16 %v1114, %v1113
    %v1134 = vpack.c.bf16 %v1116, %v1115
    %v1135 = vpack.c.bf16 %v1118, %v1117
    %v1136 = vpack.c.bf16 %v1120, %v1119
    %v1137 = vld [vmem:[#allocation10] sm:$0xff]
    %v1138 = vld [vmem:[#allocation10 + $0x8] sm:$0xff]
    %v1139 = vld [vmem:[#allocation10 + $0x10] sm:$0xff]
    %v1140 = vld [vmem:[#allocation10 + $0x18] sm:$0xff]
    %v1141 = vld [vmem:[#allocation10 + $0x20] sm:$0xff]
    %v1142 = vld [vmem:[#allocation10 + $0x28] sm:$0xff]
    %v1143 = vld [vmem:[#allocation10 + $0x30] sm:$0xff]
    %v1144 = vld [vmem:[#allocation10 + $0x38] sm:$0xff]
    %v1145 = vld [vmem:[#allocation10 + $0x40] sm:$0xff]
    %v1146 = vld [vmem:[#allocation10 + $0x48] sm:$0xff]
    %v1147 = vld [vmem:[#allocation10 + $0x50] sm:$0xff]
    %v1148 = vld [vmem:[#allocation10 + $0x58] sm:$0xff]
    %v1149 = vld [vmem:[#allocation10 + $0x60] sm:$0xff]
    %v1150 = vld [vmem:[#allocation10 + $0x68] sm:$0xff]
    %v1151 = vld [vmem:[#allocation10 + $0x70] sm:$0xff]
    %v1152 = vld [vmem:[#allocation10 + $0x78] sm:$0xff]
    %v1153 = vld [vmem:[%s10] sm:$0x3]
    %v1155 = vperm.slane %v1153, 0
    %v1156 = vperm.slane %v1153, 1
    %v1175 = vunpack.c.l.b16 %v1137
    %v1176 = vunpack.c.h.b16 %v1137
    %v1177 = vunpack.c.l.b16 %v1138
    %v1178 = vunpack.c.h.b16 %v1138
    %v1179 = vunpack.c.l.b16 %v1139
    %v1180 = vunpack.c.h.b16 %v1139
    %v1181 = vunpack.c.l.b16 %v1140
    %v1182 = vunpack.c.h.b16 %v1140
    %v1183 = vunpack.c.l.b16 %v1141
    %v1184 = vunpack.c.h.b16 %v1141
    %v1185 = vunpack.c.l.b16 %v1142
    %v1186 = vunpack.c.h.b16 %v1142
    %v1187 = vunpack.c.l.b16 %v1143
    %v1188 = vunpack.c.h.b16 %v1143
    %v1189 = vunpack.c.l.b16 %v1144
    %v1190 = vunpack.c.h.b16 %v1144
    %v1191 = vunpack.c.l.b16 %v1145
    %v1192 = vunpack.c.h.b16 %v1145
    %v1193 = vunpack.c.l.b16 %v1146
    %v1194 = vunpack.c.h.b16 %v1146
    %v1195 = vunpack.c.l.b16 %v1147
    %v1196 = vunpack.c.h.b16 %v1147
    %v1197 = vunpack.c.l.b16 %v1148
    %v1198 = vunpack.c.h.b16 %v1148
    %v1199 = vunpack.c.l.b16 %v1149
    %v1200 = vunpack.c.h.b16 %v1149
    %v1201 = vunpack.c.l.b16 %v1150
    %v1202 = vunpack.c.h.b16 %v1150
    %v1203 = vunpack.c.l.b16 %v1151
    %v1204 = vunpack.c.h.b16 %v1151
    %v1205 = vunpack.c.l.b16 %v1152
    %v1206 = vunpack.c.h.b16 %v1152
    %v1207 = vpack.c.b16 %v1177, %v1175
    %v1208 = vpack.c.b16 %v1178, %v1176
    %v1209 = vpack.c.b16 %v1181, %v1179
    %v1210 = vpack.c.b16 %v1182, %v1180
    %v1211 = vpack.c.b16 %v1185, %v1183
    %v1212 = vpack.c.b16 %v1186, %v1184
    %v1213 = vpack.c.b16 %v1189, %v1187
    %v1214 = vpack.c.b16 %v1190, %v1188
    %v1215 = vpack.c.b16 %v1193, %v1191
    %v1216 = vpack.c.b16 %v1194, %v1192
    %v1217 = vpack.c.b16 %v1197, %v1195
    %v1218 = vpack.c.b16 %v1198, %v1196
    %v1219 = vpack.c.b16 %v1201, %v1199
    %v1220 = vpack.c.b16 %v1202, %v1200
    %v1221 = vpack.c.b16 %v1205, %v1203
    %v1222 = vpack.c.b16 %v1206, %v1204
    %1239 = vmatpush.bf16.msra.mxu0 %v1221
    %1240 = vmatpush.bf16.msra.mxu0 %v1219
    %1241 = vmatpush.bf16.msra.mxu0 %v1217
    %1242 = vmatpush.bf16.msra.mxu0 %v1215
    %1243 = vmatpush.bf16.msra.mxu0 %v1213
    %1244 = vmatpush.bf16.msra.mxu0 %v1211
    %1245 = vmatpush.bf16.msra.mxu0 %v1209
    %1246 = vmatpush.bf16.msra.mxu0 %v1207
    %1247 = vmatmul.bf16.gmra.mxu0 %v1121
    %v1248 = vpop.f32.mrf.mxu0
    %v1249 = vadd.f32 %v1155, %v1248
    %v1250 = vpop.f32.mrf.mxu0
    %v1251 = vadd.f32 %v1155, %v1250
    %1252 = vmatmul.bf16.gmra.mxu0 %v1122
    %v1253 = vpop.f32.mrf.mxu0
    %v1254 = vadd.f32 %v1155, %v1253
    %v1255 = vpop.f32.mrf.mxu0
    %v1256 = vadd.f32 %v1155, %v1255
    %1257 = vmatmul.bf16.gmra.mxu0 %v1123
    %v1258 = vpop.f32.mrf.mxu0
    %v1259 = vadd.f32 %v1155, %v1258
    %v1260 = vpop.f32.mrf.mxu0
    %v1261 = vadd.f32 %v1155, %v1260
    %1262 = vmatmul.bf16.gmra.mxu0 %v1124
    %v1263 = vpop.f32.mrf.mxu0
    %v1264 = vadd.f32 %v1155, %v1263
    %v1265 = vpop.f32.mrf.mxu0
    %v1266 = vadd.f32 %v1155, %v1265
    %1267 = vmatmul.bf16.gmra.mxu0 %v1125
    %v1268 = vpop.f32.mrf.mxu0
    %v1269 = vadd.f32 %v1155, %v1268
    %v1270 = vpop.f32.mrf.mxu0
    %v1271 = vadd.f32 %v1155, %v1270
    %1272 = vmatmul.bf16.gmra.mxu0 %v1126
    %v1273 = vpop.f32.mrf.mxu0
    %v1274 = vadd.f32 %v1155, %v1273
    %v1275 = vpop.f32.mrf.mxu0
    %v1276 = vadd.f32 %v1155, %v1275
    %1277 = vmatmul.bf16.gmra.mxu0 %v1127
    %v1278 = vpop.f32.mrf.mxu0
    %v1279 = vadd.f32 %v1155, %v1278
    %v1280 = vpop.f32.mrf.mxu0
    %v1281 = vadd.f32 %v1155, %v1280
    %1282 = vmatmul.bf16.gmra.mxu0 %v1128
    %v1283 = vpop.f32.mrf.mxu0
    %v1284 = vadd.f32 %v1155, %v1283
    %v1285 = vpop.f32.mrf.mxu0
    %v1286 = vadd.f32 %v1155, %v1285
    %1287 = vmatmul.bf16.gmra.mxu0 %v1129
    %v1288 = vpop.f32.mrf.mxu0
    %v1289 = vadd.f32 %v1155, %v1288
    %v1290 = vpop.f32.mrf.mxu0
    %v1291 = vadd.f32 %v1155, %v1290
    %1292 = vmatmul.bf16.gmra.mxu0 %v1130
    %v1293 = vpop.f32.mrf.mxu0
    %v1294 = vadd.f32 %v1155, %v1293
    %v1295 = vpop.f32.mrf.mxu0
    %v1296 = vadd.f32 %v1155, %v1295
    %1297 = vmatmul.bf16.gmra.mxu0 %v1131
    %v1298 = vpop.f32.mrf.mxu0
    %v1299 = vadd.f32 %v1155, %v1298
    %v1300 = vpop.f32.mrf.mxu0
    %v1301 = vadd.f32 %v1155, %v1300
    %1302 = vmatmul.bf16.gmra.mxu0 %v1132
    %v1303 = vpop.f32.mrf.mxu0
    %v1304 = vadd.f32 %v1155, %v1303
    %v1305 = vpop.f32.mrf.mxu0
    %v1306 = vadd.f32 %v1155, %v1305
    %1307 = vmatmul.bf16.gmra.mxu0 %v1133
    %v1308 = vpop.f32.mrf.mxu0
    %v1309 = vadd.f32 %v1155, %v1308
    %v1310 = vpop.f32.mrf.mxu0
    %v1311 = vadd.f32 %v1155, %v1310
    %1312 = vmatmul.bf16.gmra.mxu0 %v1134
    %v1313 = vpop.f32.mrf.mxu0
    %v1314 = vadd.f32 %v1155, %v1313
    %v1315 = vpop.f32.mrf.mxu0
    %v1316 = vadd.f32 %v1155, %v1315
    %1317 = vmatmul.bf16.gmra.mxu0 %v1135
    %v1318 = vpop.f32.mrf.mxu0
    %v1319 = vadd.f32 %v1155, %v1318
    %v1320 = vpop.f32.mrf.mxu0
    %v1321 = vadd.f32 %v1155, %v1320
    %1322 = vmatmul.bf16.gmra.mxu0 %v1136
    %v1323 = vpop.f32.mrf.mxu0
    %v1324 = vadd.f32 %v1155, %v1323
    %v1325 = vpop.f32.mrf.mxu0
    %v1326 = vadd.f32 %v1155, %v1325
    %1327 = vdwg.mxu0
    %1328 = vmatpush.bf16.msra.mxu0 %v1222
    %1329 = vmatpush.bf16.msra.mxu0 %v1220
    %1330 = vmatpush.bf16.msra.mxu0 %v1218
    %1331 = vmatpush.bf16.msra.mxu0 %v1216
    %1332 = vmatpush.bf16.msra.mxu0 %v1214
    %1333 = vmatpush.bf16.msra.mxu0 %v1212
    %1334 = vmatpush.bf16.msra.mxu0 %v1210
    %1335 = vmatpush.bf16.msra.mxu0 %v1208
    %1336 = vmatmul.bf16.gmra.mxu0 %v1121
    %v1337 = vpop.f32.mrf.mxu0
    %v1338 = vadd.f32 %v1156, %v1337
    %v1339 = vpop.f32.mrf.mxu0
    %v1340 = vadd.f32 %v1156, %v1339
    %1341 = vmatmul.bf16.gmra.mxu0 %v1122
    %v1342 = vpop.f32.mrf.mxu0
    %v1343 = vadd.f32 %v1156, %v1342
    %v1344 = vpop.f32.mrf.mxu0
    %v1345 = vadd.f32 %v1156, %v1344
    %1346 = vmatmul.bf16.gmra.mxu0 %v1123
    %v1347 = vpop.f32.mrf.mxu0
    %v1348 = vadd.f32 %v1156, %v1347
    %v1349 = vpop.f32.mrf.mxu0
    %v1350 = vadd.f32 %v1156, %v1349
    %1351 = vmatmul.bf16.gmra.mxu0 %v1124
    %v1352 = vpop.f32.mrf.mxu0
    %v1353 = vadd.f32 %v1156, %v1352
    %v1354 = vpop.f32.mrf.mxu0
    %v1355 = vadd.f32 %v1156, %v1354
    %1356 = vmatmul.bf16.gmra.mxu0 %v1125
    %v1357 = vpop.f32.mrf.mxu0
    %v1358 = vadd.f32 %v1156, %v1357
    %v1359 = vpop.f32.mrf.mxu0
    %v1360 = vadd.f32 %v1156, %v1359
    %1361 = vmatmul.bf16.gmra.mxu0 %v1126
    %v1362 = vpop.f32.mrf.mxu0
    %v1363 = vadd.f32 %v1156, %v1362
    %v1364 = vpop.f32.mrf.mxu0
    %v1365 = vadd.f32 %v1156, %v1364
    %1366 = vmatmul.bf16.gmra.mxu0 %v1127
    %v1367 = vpop.f32.mrf.mxu0
    %v1368 = vadd.f32 %v1156, %v1367
    %v1369 = vpop.f32.mrf.mxu0
    %v1370 = vadd.f32 %v1156, %v1369
    %1371 = vmatmul.bf16.gmra.mxu0 %v1128
    %v1372 = vpop.f32.mrf.mxu0
    %v1373 = vadd.f32 %v1156, %v1372
    %v1374 = vpop.f32.mrf.mxu0
    %v1375 = vadd.f32 %v1156, %v1374
    %1376 = vmatmul.bf16.gmra.mxu0 %v1129
    %v1377 = vpop.f32.mrf.mxu0
    %v1378 = vadd.f32 %v1156, %v1377
    %v1379 = vpop.f32.mrf.mxu0
    %v1380 = vadd.f32 %v1156, %v1379
    %1381 = vmatmul.bf16.gmra.mxu0 %v1130
    %v1382 = vpop.f32.mrf.mxu0
    %v1383 = vadd.f32 %v1156, %v1382
    %v1384 = vpop.f32.mrf.mxu0
    %v1385 = vadd.f32 %v1156, %v1384
    %1386 = vmatmul.bf16.gmra.mxu0 %v1131
    %v1387 = vpop.f32.mrf.mxu0
    %v1388 = vadd.f32 %v1156, %v1387
    %v1389 = vpop.f32.mrf.mxu0
    %v1390 = vadd.f32 %v1156, %v1389
    %1391 = vmatmul.bf16.gmra.mxu0 %v1132
    %v1392 = vpop.f32.mrf.mxu0
    %v1393 = vadd.f32 %v1156, %v1392
    %v1394 = vpop.f32.mrf.mxu0
    %v1395 = vadd.f32 %v1156, %v1394
    %1396 = vmatmul.bf16.gmra.mxu0 %v1133
    %v1397 = vpop.f32.mrf.mxu0
    %v1398 = vadd.f32 %v1156, %v1397
    %v1399 = vpop.f32.mrf.mxu0
    %v1400 = vadd.f32 %v1156, %v1399
    %1401 = vmatmul.bf16.gmra.mxu0 %v1134
    %v1402 = vpop.f32.mrf.mxu0
    %v1403 = vadd.f32 %v1156, %v1402
    %v1404 = vpop.f32.mrf.mxu0
    %v1405 = vadd.f32 %v1156, %v1404
    %1406 = vmatmul.bf16.gmra.mxu0 %v1135
    %v1407 = vpop.f32.mrf.mxu0
    %v1408 = vadd.f32 %v1156, %v1407
    %v1409 = vpop.f32.mrf.mxu0
    %v1410 = vadd.f32 %v1156, %v1409
    %1411 = vmatmul.bf16.gmra.mxu0 %v1136
    %v1412 = vpop.f32.mrf.mxu0
    %v1413 = vadd.f32 %v1156, %v1412
    %v1414 = vpop.f32.mrf.mxu0
    %v1415 = vadd.f32 %v1156, %v1414
    %1416 = vdwg.mxu0
    %v1417 = vmax.f32 %v1249, 0.0
    %v1418 = vmax.f32 %v1338, 0.0
    %v1419 = vmax.f32 %v1251, 0.0
    %v1420 = vmax.f32 %v1340, 0.0
    %v1421 = vmax.f32 %v1254, 0.0
    %v1422 = vmax.f32 %v1343, 0.0
    %v1423 = vmax.f32 %v1256, 0.0
    %v1424 = vmax.f32 %v1345, 0.0
    %v1425 = vmax.f32 %v1259, 0.0
    %v1426 = vmax.f32 %v1348, 0.0
    %v1427 = vmax.f32 %v1261, 0.0
    %v1428 = vmax.f32 %v1350, 0.0
    %v1429 = vmax.f32 %v1264, 0.0
    %v1430 = vmax.f32 %v1353, 0.0
    %v1431 = vmax.f32 %v1266, 0.0
    %v1432 = vmax.f32 %v1355, 0.0
    %v1433 = vmax.f32 %v1269, 0.0
    %v1434 = vmax.f32 %v1358, 0.0
    %v1435 = vmax.f32 %v1271, 0.0
    %v1436 = vmax.f32 %v1360, 0.0
    %v1437 = vmax.f32 %v1274, 0.0
    %v1438 = vmax.f32 %v1363, 0.0
    %v1439 = vmax.f32 %v1276, 0.0
    %v1440 = vmax.f32 %v1365, 0.0
    %v1441 = vmax.f32 %v1279, 0.0
    %v1442 = vmax.f32 %v1368, 0.0
    %v1443 = vmax.f32 %v1281, 0.0
    %v1444 = vmax.f32 %v1370, 0.0
    %v1445 = vmax.f32 %v1284, 0.0
    %v1446 = vmax.f32 %v1373, 0.0
    %v1447 = vmax.f32 %v1286, 0.0
    %v1448 = vmax.f32 %v1375, 0.0
    %v1449 = vmax.f32 %v1289, 0.0
    %v1450 = vmax.f32 %v1378, 0.0
    %v1451 = vmax.f32 %v1291, 0.0
    %v1452 = vmax.f32 %v1380, 0.0
    %v1453 = vmax.f32 %v1294, 0.0
    %v1454 = vmax.f32 %v1383, 0.0
    %v1455 = vmax.f32 %v1296, 0.0
    %v1456 = vmax.f32 %v1385, 0.0
    %v1457 = vmax.f32 %v1299, 0.0
    %v1458 = vmax.f32 %v1388, 0.0
    %v1459 = vmax.f32 %v1301, 0.0
    %v1460 = vmax.f32 %v1390, 0.0
    %v1461 = vmax.f32 %v1304, 0.0
    %v1462 = vmax.f32 %v1393, 0.0
    %v1463 = vmax.f32 %v1306, 0.0
    %v1464 = vmax.f32 %v1395, 0.0
    %v1465 = vmax.f32 %v1309, 0.0
    %v1466 = vmax.f32 %v1398, 0.0
    %v1467 = vmax.f32 %v1311, 0.0
    %v1468 = vmax.f32 %v1400, 0.0
    %v1469 = vmax.f32 %v1314, 0.0
    %v1470 = vmax.f32 %v1403, 0.0
    %v1471 = vmax.f32 %v1316, 0.0
    %v1472 = vmax.f32 %v1405, 0.0
    %v1473 = vmax.f32 %v1319, 0.0
    %v1474 = vmax.f32 %v1408, 0.0
    %v1475 = vmax.f32 %v1321, 0.0
    %v1476 = vmax.f32 %v1410, 0.0
    %v1477 = vmax.f32 %v1324, 0.0
    %v1478 = vmax.f32 %v1413, 0.0
    %v1479 = vmax.f32 %v1326, 0.0
    %v1480 = vmax.f32 %v1415, 0.0
    %v1481 = vmax.f32 %v1417, %v1419
    %v1482 = vmax.f32 %v1481, %v1421
    %v1483 = vmax.f32 %v1482, %v1423
    %v1484 = vmax.f32 %v1483, %v1425
    %v1485 = vmax.f32 %v1484, %v1427
    %v1486 = vmax.f32 %v1485, %v1429
    %v1487 = vmax.f32 %v1486, %v1431
    %v1488 = vmax.f32 %v1487, %v1433
    %v1489 = vmax.f32 %v1488, %v1435
    %v1490 = vmax.f32 %v1489, %v1437
    %v1491 = vmax.f32 %v1490, %v1439
    %v1492 = vmax.f32 %v1491, %v1441
    %v1493 = vmax.f32 %v1492, %v1443
    %v1494 = vmax.f32 %v1493, %v1445
    %v1495 = vmax.f32 %v1494, %v1447
    %v1496 = vrot.slane %v1495, 4
    %v1497 = vmax.f32 %v1495, %v1496
    %v1498 = vrot.slane %v1497, 2
    %v1499 = vmax.f32 %v1497, %v1498
    %v1500 = vrot.slane %v1499, 1
    %v1501 = vmax.f32 %v1499, %v1500
    %v1502 = vmax.f32 %v1418, %v1420
    %v1503 = vmax.f32 %v1502, %v1422
    %v1504 = vmax.f32 %v1503, %v1424
    %v1505 = vmax.f32 %v1504, %v1426
    %v1506 = vmax.f32 %v1505, %v1428
    %v1507 = vmax.f32 %v1506, %v1430
    %v1508 = vmax.f32 %v1507, %v1432
    %v1509 = vmax.f32 %v1508, %v1434
    %v1510 = vmax.f32 %v1509, %v1436
    %v1511 = vmax.f32 %v1510, %v1438
    %v1512 = vmax.f32 %v1511, %v1440
    %v1513 = vmax.f32 %v1512, %v1442
    %v1514 = vmax.f32 %v1513, %v1444
    %v1515 = vmax.f32 %v1514, %v1446
    %v1516 = vmax.f32 %v1515, %v1448
    %v1517 = vrot.slane %v1516, 4
    %v1518 = vmax.f32 %v1516, %v1517
    %v1519 = vrot.slane %v1518, 2
    %v1520 = vmax.f32 %v1518, %v1519
    %v1521 = vrot.slane %v1520, 1
    %v1522 = vmax.f32 %v1520, %v1521
    %v1523 = vmax.f32 %v1449, %v1451
    %v1524 = vmax.f32 %v1523, %v1453
    %v1525 = vmax.f32 %v1524, %v1455
    %v1526 = vmax.f32 %v1525, %v1457
    %v1527 = vmax.f32 %v1526, %v1459
    %v1528 = vmax.f32 %v1527, %v1461
    %v1529 = vmax.f32 %v1528, %v1463
    %v1530 = vmax.f32 %v1529, %v1465
    %v1531 = vmax.f32 %v1530, %v1467
    %v1532 = vmax.f32 %v1531, %v1469
    %v1533 = vmax.f32 %v1532, %v1471
    %v1534 = vmax.f32 %v1533, %v1473
    %v1535 = vmax.f32 %v1534, %v1475
    %v1536 = vmax.f32 %v1535, %v1477
    %v1537 = vmax.f32 %v1536, %v1479
    %v1538 = vrot.slane %v1537, 4
    %v1539 = vmax.f32 %v1537, %v1538
    %v1540 = vrot.slane %v1539, 2
    %v1541 = vmax.f32 %v1539, %v1540
    %v1542 = vrot.slane %v1541, 1
    %v1543 = vmax.f32 %v1541, %v1542
    %v1544 = vmax.f32 %v1450, %v1452
    %v1545 = vmax.f32 %v1544, %v1454
    %v1546 = vmax.f32 %v1545, %v1456
    %v1547 = vmax.f32 %v1546, %v1458
    %v1548 = vmax.f32 %v1547, %v1460
    %v1549 = vmax.f32 %v1548, %v1462
    %v1550 = vmax.f32 %v1549, %v1464
    %v1551 = vmax.f32 %v1550, %v1466
    %v1552 = vmax.f32 %v1551, %v1468
    %v1553 = vmax.f32 %v1552, %v1470
    %v1554 = vmax.f32 %v1553, %v1472
    %v1555 = vmax.f32 %v1554, %v1474
    %v1556 = vmax.f32 %v1555, %v1476
    %v1557 = vmax.f32 %v1556, %v1478
    %v1558 = vmax.f32 %v1557, %v1480
    %v1559 = vrot.slane %v1558, 4
    %v1560 = vmax.f32 %v1558, %v1559
    %v1561 = vrot.slane %v1560, 2
    %v1562 = vmax.f32 %v1560, %v1561
    %v1563 = vrot.slane %v1562, 1
    %v1564 = vmax.f32 %v1562, %v1563
    %v1565 = vpack.c.bf16 %v1501, %v1501
    %v1566 = vpack.c.bf16 %v1522, %v1522
    %v1567 = vpack.c.bf16 %v1543, %v1543
    %v1568 = vpack.c.bf16 %v1564, %v1564
    %v1569 = vld [vmem:[#allocation11] sm:$0xff]
    %v1570 = vld [vmem:[#allocation11 + $0x8] sm:$0xff]
    %v1571 = vld [vmem:[#allocation11 + $0x10] sm:$0xff]
    %v1572 = vld [vmem:[#allocation11 + $0x18] sm:$0xff]
    %v1573 = vld [vmem:[#allocation11 + $0x20] sm:$0xff]
    %v1574 = vld [vmem:[#allocation11 + $0x28] sm:$0xff]
    %v1575 = vld [vmem:[#allocation11 + $0x30] sm:$0xff]
    %v1576 = vld [vmem:[#allocation11 + $0x38] sm:$0xff]
    %v1577 = vld [vmem:[#allocation11 + $0x40] sm:$0xff]
    %v1578 = vld [vmem:[#allocation11 + $0x48] sm:$0xff]
    %v1579 = vld [vmem:[#allocation11 + $0x50] sm:$0xff]
    %v1580 = vld [vmem:[#allocation11 + $0x58] sm:$0xff]
    %v1581 = vld [vmem:[#allocation11 + $0x60] sm:$0xff]
    %v1582 = vld [vmem:[#allocation11 + $0x68] sm:$0xff]
    %v1583 = vld [vmem:[#allocation11 + $0x70] sm:$0xff]
    %v1584 = vld [vmem:[#allocation11 + $0x78] sm:$0xff]
    %v1585 = vld [vmem:[#allocation11 + $0x80] sm:$0xff]
    %v1586 = vld [vmem:[#allocation11 + $0x88] sm:$0xff]
    %v1587 = vld [vmem:[#allocation11 + $0x90] sm:$0xff]
    %v1588 = vld [vmem:[#allocation11 + $0x98] sm:$0xff]
    %v1589 = vld [vmem:[#allocation11 + $0xa0] sm:$0xff]
    %v1590 = vld [vmem:[#allocation11 + $0xa8] sm:$0xff]
    %v1591 = vld [vmem:[#allocation11 + $0xb0] sm:$0xff]
    %v1592 = vld [vmem:[#allocation11 + $0xb8] sm:$0xff]
    %v1593 = vld [vmem:[#allocation11 + $0xc0] sm:$0xff]
    %v1594 = vld [vmem:[#allocation11 + $0xc8] sm:$0xff]
    %v1595 = vld [vmem:[#allocation11 + $0xd0] sm:$0xff]
    %v1596 = vld [vmem:[#allocation11 + $0xd8] sm:$0xff]
    %v1597 = vld [vmem:[#allocation11 + $0xe0] sm:$0xff]
    %v1598 = vld [vmem:[#allocation11 + $0xe8] sm:$0xff]
    %v1599 = vld [vmem:[#allocation11 + $0xf0] sm:$0xff]
    %v1600 = vld [vmem:[#allocation11 + $0xf8] sm:$0xff]
    %v1601 = vld [vmem:[#allocation11 + $0x100] sm:$0xff]
    %v1602 = vld [vmem:[#allocation11 + $0x108] sm:$0xff]
    %v1603 = vld [vmem:[#allocation11 + $0x110] sm:$0xff]
    %v1604 = vld [vmem:[#allocation11 + $0x118] sm:$0xff]
    %v1605 = vld [vmem:[#allocation11 + $0x120] sm:$0xff]
    %v1606 = vld [vmem:[#allocation11 + $0x128] sm:$0xff]
    %v1607 = vld [vmem:[#allocation11 + $0x130] sm:$0xff]
    %v1608 = vld [vmem:[#allocation11 + $0x138] sm:$0xff]
    %v1609 = vld [vmem:[#allocation11 + $0x140] sm:$0xff]
    %v1610 = vld [vmem:[#allocation11 + $0x148] sm:$0xff]
    %v1611 = vld [vmem:[#allocation11 + $0x150] sm:$0xff]
    %v1612 = vld [vmem:[#allocation11 + $0x158] sm:$0xff]
    %v1613 = vld [vmem:[#allocation11 + $0x160] sm:$0xff]
    %v1614 = vld [vmem:[#allocation11 + $0x168] sm:$0xff]
    %v1615 = vld [vmem:[#allocation11 + $0x170] sm:$0xff]
    %v1616 = vld [vmem:[#allocation11 + $0x178] sm:$0xff]
    %v1617 = vld [vmem:[#allocation11 + $0x180] sm:$0xff]
    %v1618 = vld [vmem:[#allocation11 + $0x188] sm:$0xff]
    %v1619 = vld [vmem:[#allocation11 + $0x190] sm:$0xff]
    %v1620 = vld [vmem:[#allocation11 + $0x198] sm:$0xff]
    %v1621 = vld [vmem:[#allocation11 + $0x1a0] sm:$0xff]
    %v1622 = vld [vmem:[#allocation11 + $0x1a8] sm:$0xff]
    %v1623 = vld [vmem:[#allocation11 + $0x1b0] sm:$0xff]
    %v1624 = vld [vmem:[#allocation11 + $0x1b8] sm:$0xff]
    %v1625 = vld [vmem:[#allocation11 + $0x1c0] sm:$0xff]
    %v1626 = vld [vmem:[#allocation11 + $0x1c8] sm:$0xff]
    %v1627 = vld [vmem:[#allocation11 + $0x1d0] sm:$0xff]
    %v1628 = vld [vmem:[#allocation11 + $0x1d8] sm:$0xff]
    %v1629 = vld [vmem:[#allocation11 + $0x1e0] sm:$0xff]
    %v1630 = vld [vmem:[#allocation11 + $0x1e8] sm:$0xff]
    %v1631 = vld [vmem:[#allocation11 + $0x1f0] sm:$0xff]
    %v1632 = vld [vmem:[#allocation11 + $0x1f8] sm:$0xff]
    %v1633 = vld [vmem:[%s12] sm:$0xf]
    %v1635 = vperm.slane %v1633, 0
    %v1636 = vperm.slane %v1633, 1
    %v1637 = vperm.slane %v1633, 2
    %v1638 = vperm.slane %v1633, 3
    %v1647 = vunpack.c.l.b16 %v1565
    %v1648 = vunpack.c.l.b16 %v1566
    %v1649 = vunpack.c.l.b16 %v1567
    %v1650 = vunpack.c.l.b16 %v1568
    %vm1651 = vcmask 1041409
    %v1652 = vsel %vm1651, %v1649, %v1647
    %v1653 = vsel %vm1651, %v1650, %v1648
    %v1654 = vpack.c.b16 %v1652, %v1652
    %v1655 = vpack.c.b16 %v1653, %v1653
    %v1722 = vunpack.c.l.b16 %v1569
    %v1723 = vunpack.c.h.b16 %v1569
    %v1724 = vunpack.c.l.b16 %v1570
    %v1725 = vunpack.c.h.b16 %v1570
    %v1726 = vunpack.c.l.b16 %v1571
    %v1727 = vunpack.c.h.b16 %v1571
    %v1728 = vunpack.c.l.b16 %v1572
    %v1729 = vunpack.c.h.b16 %v1572
    %v1730 = vunpack.c.l.b16 %v1573
    %v1731 = vunpack.c.h.b16 %v1573
    %v1732 = vunpack.c.l.b16 %v1574
    %v1733 = vunpack.c.h.b16 %v1574
    %v1734 = vunpack.c.l.b16 %v1575
    %v1735 = vunpack.c.h.b16 %v1575
    %v1736 = vunpack.c.l.b16 %v1576
    %v1737 = vunpack.c.h.b16 %v1576
    %v1738 = vunpack.c.l.b16 %v1577
    %v1739 = vunpack.c.h.b16 %v1577
    %v1740 = vunpack.c.l.b16 %v1578
    %v1741 = vunpack.c.h.b16 %v1578
    %v1742 = vunpack.c.l.b16 %v1579
    %v1743 = vunpack.c.h.b16 %v1579
    %v1744 = vunpack.c.l.b16 %v1580
    %v1745 = vunpack.c.h.b16 %v1580
    %v1746 = vunpack.c.l.b16 %v1581
    %v1747 = vunpack.c.h.b16 %v1581
    %v1748 = vunpack.c.l.b16 %v1582
    %v1749 = vunpack.c.h.b16 %v1582
    %v1750 = vunpack.c.l.b16 %v1583
    %v1751 = vunpack.c.h.b16 %v1583
    %v1752 = vunpack.c.l.b16 %v1584
    %v1753 = vunpack.c.h.b16 %v1584
    %v1754 = vunpack.c.l.b16 %v1585
    %v1755 = vunpack.c.h.b16 %v1585
    %v1756 = vunpack.c.l.b16 %v1586
    %v1757 = vunpack.c.h.b16 %v1586
    %v1758 = vunpack.c.l.b16 %v1587
    %v1759 = vunpack.c.h.b16 %v1587
    %v1760 = vunpack.c.l.b16 %v1588
    %v1761 = vunpack.c.h.b16 %v1588
    %v1762 = vunpack.c.l.b16 %v1589
    %v1763 = vunpack.c.h.b16 %v1589
    %v1764 = vunpack.c.l.b16 %v1590
    %v1765 = vunpack.c.h.b16 %v1590
    %v1766 = vunpack.c.l.b16 %v1591
    %v1767 = vunpack.c.h.b16 %v1591
    %v1768 = vunpack.c.l.b16 %v1592
    %v1769 = vunpack.c.h.b16 %v1592
    %v1770 = vunpack.c.l.b16 %v1593
    %v1771 = vunpack.c.h.b16 %v1593
    %v1772 = vunpack.c.l.b16 %v1594
    %v1773 = vunpack.c.h.b16 %v1594
    %v1774 = vunpack.c.l.b16 %v1595
    %v1775 = vunpack.c.h.b16 %v1595
    %v1776 = vunpack.c.l.b16 %v1596
    %v1777 = vunpack.c.h.b16 %v1596
    %v1778 = vunpack.c.l.b16 %v1597
    %v1779 = vunpack.c.h.b16 %v1597
    %v1780 = vunpack.c.l.b16 %v1598
    %v1781 = vunpack.c.h.b16 %v1598
    %v1782 = vunpack.c.l.b16 %v1599
    %v1783 = vunpack.c.h.b16 %v1599
    %v1784 = vunpack.c.l.b16 %v1600
    %v1785 = vunpack.c.h.b16 %v1600
    %v1786 = vunpack.c.l.b16 %v1601
    %v1787 = vunpack.c.h.b16 %v1601
    %v1788 = vunpack.c.l.b16 %v1602
    %v1789 = vunpack.c.h.b16 %v1602
    %v1790 = vunpack.c.l.b16 %v1603
    %v1791 = vunpack.c.h.b16 %v1603
    %v1792 = vunpack.c.l.b16 %v1604
    %v1793 = vunpack.c.h.b16 %v1604
    %v1794 = vunpack.c.l.b16 %v1605
    %v1795 = vunpack.c.h.b16 %v1605
    %v1796 = vunpack.c.l.b16 %v1606
    %v1797 = vunpack.c.h.b16 %v1606
    %v1798 = vunpack.c.l.b16 %v1607
    %v1799 = vunpack.c.h.b16 %v1607
    %v1800 = vunpack.c.l.b16 %v1608
    %v1801 = vunpack.c.h.b16 %v1608
    %v1802 = vunpack.c.l.b16 %v1609
    %v1803 = vunpack.c.h.b16 %v1609
    %v1804 = vunpack.c.l.b16 %v1610
    %v1805 = vunpack.c.h.b16 %v1610
    %v1806 = vunpack.c.l.b16 %v1611
    %v1807 = vunpack.c.h.b16 %v1611
    %v1808 = vunpack.c.l.b16 %v1612
    %v1809 = vunpack.c.h.b16 %v1612
    %v1810 = vunpack.c.l.b16 %v1613
    %v1811 = vunpack.c.h.b16 %v1613
    %v1812 = vunpack.c.l.b16 %v1614
    %v1813 = vunpack.c.h.b16 %v1614
    %v1814 = vunpack.c.l.b16 %v1615
    %v1815 = vunpack.c.h.b16 %v1615
    %v1816 = vunpack.c.l.b16 %v1616
    %v1817 = vunpack.c.h.b16 %v1616
    %v1818 = vunpack.c.l.b16 %v1617
    %v1819 = vunpack.c.h.b16 %v1617
    %v1820 = vunpack.c.l.b16 %v1618
    %v1821 = vunpack.c.h.b16 %v1618
    %v1822 = vunpack.c.l.b16 %v1619
    %v1823 = vunpack.c.h.b16 %v1619
    %v1824 = vunpack.c.l.b16 %v1620
    %v1825 = vunpack.c.h.b16 %v1620
    %v1826 = vunpack.c.l.b16 %v1621
    %v1827 = vunpack.c.h.b16 %v1621
    %v1828 = vunpack.c.l.b16 %v1622
    %v1829 = vunpack.c.h.b16 %v1622
    %v1830 = vunpack.c.l.b16 %v1623
    %v1831 = vunpack.c.h.b16 %v1623
    %v1832 = vunpack.c.l.b16 %v1624
    %v1833 = vunpack.c.h.b16 %v1624
    %v1834 = vunpack.c.l.b16 %v1625
    %v1835 = vunpack.c.h.b16 %v1625
    %v1836 = vunpack.c.l.b16 %v1626
    %v1837 = vunpack.c.h.b16 %v1626
    %v1838 = vunpack.c.l.b16 %v1627
    %v1839 = vunpack.c.h.b16 %v1627
    %v1840 = vunpack.c.l.b16 %v1628
    %v1841 = vunpack.c.h.b16 %v1628
    %v1842 = vunpack.c.l.b16 %v1629
    %v1843 = vunpack.c.h.b16 %v1629
    %v1844 = vunpack.c.l.b16 %v1630
    %v1845 = vunpack.c.h.b16 %v1630
    %v1846 = vunpack.c.l.b16 %v1631
    %v1847 = vunpack.c.h.b16 %v1631
    %v1848 = vunpack.c.l.b16 %v1632
    %v1849 = vunpack.c.h.b16 %v1632
    %v1850 = vpack.c.b16 %v1726, %v1722
    %v1851 = vpack.c.b16 %v1727, %v1723
    %v1852 = vpack.c.b16 %v1728, %v1724
    %v1853 = vpack.c.b16 %v1729, %v1725
    %v1854 = vpack.c.b16 %v1734, %v1730
    %v1855 = vpack.c.b16 %v1735, %v1731
    %v1856 = vpack.c.b16 %v1736, %v1732
    %v1857 = vpack.c.b16 %v1737, %v1733
    %v1858 = vpack.c.b16 %v1742, %v1738
    %v1859 = vpack.c.b16 %v1743, %v1739
    %v1860 = vpack.c.b16 %v1744, %v1740
    %v1861 = vpack.c.b16 %v1745, %v1741
    %v1862 = vpack.c.b16 %v1750, %v1746
    %v1863 = vpack.c.b16 %v1751, %v1747
    %v1864 = vpack.c.b16 %v1752, %v1748
    %v1865 = vpack.c.b16 %v1753, %v1749
    %v1866 = vpack.c.b16 %v1758, %v1754
    %v1867 = vpack.c.b16 %v1759, %v1755
    %v1868 = vpack.c.b16 %v1760, %v1756
    %v1869 = vpack.c.b16 %v1761, %v1757
    %v1870 = vpack.c.b16 %v1766, %v1762
    %v1871 = vpack.c.b16 %v1767, %v1763
    %v1872 = vpack.c.b16 %v1768, %v1764
    %v1873 = vpack.c.b16 %v1769, %v1765
    %v1874 = vpack.c.b16 %v1774, %v1770
    %v1875 = vpack.c.b16 %v1775, %v1771
    %v1876 = vpack.c.b16 %v1776, %v1772
    %v1877 = vpack.c.b16 %v1777, %v1773
    %v1878 = vpack.c.b16 %v1782, %v1778
    %v1879 = vpack.c.b16 %v1783, %v1779
    %v1880 = vpack.c.b16 %v1784, %v1780
    %v1881 = vpack.c.b16 %v1785, %v1781
    %v1882 = vpack.c.b16 %v1790, %v1786
    %v1883 = vpack.c.b16 %v1791, %v1787
    %v1884 = vpack.c.b16 %v1792, %v1788
    %v1885 = vpack.c.b16 %v1793, %v1789
    %v1886 = vpack.c.b16 %v1798, %v1794
    %v1887 = vpack.c.b16 %v1799, %v1795
    %v1888 = vpack.c.b16 %v1800, %v1796
    %v1889 = vpack.c.b16 %v1801, %v1797
    %v1890 = vpack.c.b16 %v1806, %v1802
    %v1891 = vpack.c.b16 %v1807, %v1803
    %v1892 = vpack.c.b16 %v1808, %v1804
    %v1893 = vpack.c.b16 %v1809, %v1805
    %v1894 = vpack.c.b16 %v1814, %v1810
    %v1895 = vpack.c.b16 %v1815, %v1811
    %v1896 = vpack.c.b16 %v1816, %v1812
    %v1897 = vpack.c.b16 %v1817, %v1813
    %v1898 = vpack.c.b16 %v1822, %v1818
    %v1899 = vpack.c.b16 %v1823, %v1819
    %v1900 = vpack.c.b16 %v1824, %v1820
    %v1901 = vpack.c.b16 %v1825, %v1821
    %v1902 = vpack.c.b16 %v1830, %v1826
    %v1903 = vpack.c.b16 %v1831, %v1827
    %v1904 = vpack.c.b16 %v1832, %v1828
    %v1905 = vpack.c.b16 %v1833, %v1829
    %v1906 = vpack.c.b16 %v1838, %v1834
    %v1907 = vpack.c.b16 %v1839, %v1835
    %v1908 = vpack.c.b16 %v1840, %v1836
    %v1909 = vpack.c.b16 %v1841, %v1837
    %v1910 = vpack.c.b16 %v1846, %v1842
    %v1911 = vpack.c.b16 %v1847, %v1843
    %v1912 = vpack.c.b16 %v1848, %v1844
    %v1913 = vpack.c.b16 %v1849, %v1845
    %1978 = vmatpush.bf16.msra.mxu0 %v1878
    %1979 = vmatpush.bf16.msra.mxu0 %v1874
    %1980 = vmatpush.bf16.msra.mxu0 %v1870
    %1981 = vmatpush.bf16.msra.mxu0 %v1866
    %1982 = vmatpush.bf16.msra.mxu0 %v1862
    %1983 = vmatpush.bf16.msra.mxu0 %v1858
    %1984 = vmatpush.bf16.msra.mxu0 %v1854
    %1985 = vmatpush.bf16.msra.mxu0 %v1850
    %1986 = vmatmul.bf16.gmra.mxu0 %v1654
    %v1987 = vpop.f32.mrf.mxu0
    %v1988 = vadd.f32 %v1635, %v1987
    %v1989 = vpop.f32.mrf.mxu0
    %1990 = vdwg.mxu0
    %1991 = vmatpush.bf16.msra.mxu0 %v1910
    %1992 = vmatpush.bf16.msra.mxu0 %v1906
    %1993 = vmatpush.bf16.msra.mxu0 %v1902
    %1994 = vmatpush.bf16.msra.mxu0 %v1898
    %1995 = vmatpush.bf16.msra.mxu0 %v1894
    %1996 = vmatpush.bf16.msra.mxu0 %v1890
    %1997 = vmatpush.bf16.msra.mxu0 %v1886
    %1998 = vmatpush.bf16.msra.mxu0 %v1882
    %1999 = vmatmul.bf16.gmra.mxu0 %v1655
    %v2000 = vpop.f32.mrf.mxu0
    %v2001 = vadd.f32 %v1988, %v2000
    %v2002 = vpop.f32.mrf.mxu0
    %2003 = vdwg.mxu0
    %2004 = vmatpush.bf16.msra.mxu0 %v1879
    %2005 = vmatpush.bf16.msra.mxu0 %v1875
    %2006 = vmatpush.bf16.msra.mxu0 %v1871
    %2007 = vmatpush.bf16.msra.mxu0 %v1867
    %2008 = vmatpush.bf16.msra.mxu0 %v1863
    %2009 = vmatpush.bf16.msra.mxu0 %v1859
    %2010 = vmatpush.bf16.msra.mxu0 %v1855
    %2011 = vmatpush.bf16.msra.mxu0 %v1851
    %2012 = vmatmul.bf16.gmra.mxu0 %v1654
    %v2013 = vpop.f32.mrf.mxu0
    %v2014 = vadd.f32 %v1636, %v2013
    %v2015 = vpop.f32.mrf.mxu0
    %2016 = vdwg.mxu0
    %2017 = vmatpush.bf16.msra.mxu0 %v1911
    %2018 = vmatpush.bf16.msra.mxu0 %v1907
    %2019 = vmatpush.bf16.msra.mxu0 %v1903
    %2020 = vmatpush.bf16.msra.mxu0 %v1899
    %2021 = vmatpush.bf16.msra.mxu0 %v1895
    %2022 = vmatpush.bf16.msra.mxu0 %v1891
    %2023 = vmatpush.bf16.msra.mxu0 %v1887
    %2024 = vmatpush.bf16.msra.mxu0 %v1883
    %2025 = vmatmul.bf16.gmra.mxu0 %v1655
    %v2026 = vpop.f32.mrf.mxu0
    %v2027 = vadd.f32 %v2014, %v2026
    %v2028 = vpop.f32.mrf.mxu0
    %2029 = vdwg.mxu0
    %2030 = vmatpush.bf16.msra.mxu0 %v1880
    %2031 = vmatpush.bf16.msra.mxu0 %v1876
    %2032 = vmatpush.bf16.msra.mxu0 %v1872
    %2033 = vmatpush.bf16.msra.mxu0 %v1868
    %2034 = vmatpush.bf16.msra.mxu0 %v1864
    %2035 = vmatpush.bf16.msra.mxu0 %v1860
    %2036 = vmatpush.bf16.msra.mxu0 %v1856
    %2037 = vmatpush.bf16.msra.mxu0 %v1852
    %2038 = vmatmul.bf16.gmra.mxu0 %v1654
    %v2039 = vpop.f32.mrf.mxu0
    %v2040 = vadd.f32 %v1637, %v2039
    %v2041 = vpop.f32.mrf.mxu0
    %2042 = vdwg.mxu0
    %2043 = vmatpush.bf16.msra.mxu0 %v1912
    %2044 = vmatpush.bf16.msra.mxu0 %v1908
    %2045 = vmatpush.bf16.msra.mxu0 %v1904
    %2046 = vmatpush.bf16.msra.mxu0 %v1900
    %2047 = vmatpush.bf16.msra.mxu0 %v1896
    %2048 = vmatpush.bf16.msra.mxu0 %v1892
    %2049 = vmatpush.bf16.msra.mxu0 %v1888
    %2050 = vmatpush.bf16.msra.mxu0 %v1884
    %2051 = vmatmul.bf16.gmra.mxu0 %v1655
    %v2052 = vpop.f32.mrf.mxu0
    %v2053 = vadd.f32 %v2040, %v2052
    %v2054 = vpop.f32.mrf.mxu0
    %2055 = vdwg.mxu0
    %2056 = vmatpush.bf16.msra.mxu0 %v1881
    %2057 = vmatpush.bf16.msra.mxu0 %v1877
    %2058 = vmatpush.bf16.msra.mxu0 %v1873
    %2059 = vmatpush.bf16.msra.mxu0 %v1869
    %2060 = vmatpush.bf16.msra.mxu0 %v1865
    %2061 = vmatpush.bf16.msra.mxu0 %v1861
    %2062 = vmatpush.bf16.msra.mxu0 %v1857
    %2063 = vmatpush.bf16.msra.mxu0 %v1853
    %2064 = vmatmul.bf16.gmra.mxu0 %v1654
    %v2065 = vpop.f32.mrf.mxu0
    %v2066 = vadd.f32 %v1638, %v2065
    %v2067 = vpop.f32.mrf.mxu0
    %2068 = vdwg.mxu0
    %2069 = vmatpush.bf16.msra.mxu0 %v1913
    %2070 = vmatpush.bf16.msra.mxu0 %v1909
    %2071 = vmatpush.bf16.msra.mxu0 %v1905
    %2072 = vmatpush.bf16.msra.mxu0 %v1901
    %2073 = vmatpush.bf16.msra.mxu0 %v1897
    %2074 = vmatpush.bf16.msra.mxu0 %v1893
    %2075 = vmatpush.bf16.msra.mxu0 %v1889
    %2076 = vmatpush.bf16.msra.mxu0 %v1885
    %2077 = vmatmul.bf16.gmra.mxu0 %v1655
    %v2078 = vpop.f32.mrf.mxu0
    %v2079 = vadd.f32 %v2066, %v2078
    %v2080 = vpop.f32.mrf.mxu0
    %2081 = vdwg.mxu0
    %v2082 = vmax.f32 %v2001, 0.0
    %v2083 = vmax.f32 %v2027, 0.0
    %v2084 = vmax.f32 %v2053, 0.0
    %v2085 = vmax.f32 %v2079, 0.0
    %v2086 = vpack.c.bf16 %v2082, %v2082
    %v2087 = vpack.c.bf16 %v2083, %v2083
    %v2088 = vpack.c.bf16 %v2084, %v2084
    %v2089 = vpack.c.bf16 %v2085, %v2085
    %v2090 = vld [vmem:[#allocation13] sm:$0xf]
    %v2091 = vld [vmem:[#allocation13 + $0x4] sm:$0xf]
    %v2092 = vld [vmem:[#allocation13 + $0x8] sm:$0xf]
    %v2093 = vld [vmem:[#allocation13 + $0xc] sm:$0xf]
    %v2094 = vld [vmem:[#allocation13 + $0x10] sm:$0xf]
    %v2095 = vld [vmem:[#allocation13 + $0x14] sm:$0xf]
    %v2096 = vld [vmem:[#allocation13 + $0x18] sm:$0xf]
    %v2097 = vld [vmem:[#allocation13 + $0x1c] sm:$0xf]
    %v2098 = vld [vmem:[#allocation13 + $0x20] sm:$0xf]
    %v2099 = vld [vmem:[#allocation13 + $0x24] sm:$0xf]
    %v2100 = vld [vmem:[#allocation13 + $0x28] sm:$0xf]
    %v2101 = vld [vmem:[#allocation13 + $0x2c] sm:$0xf]
    %v2102 = vld [vmem:[#allocation13 + $0x30] sm:$0xf]
    %v2103 = vld [vmem:[#allocation13 + $0x34] sm:$0xf]
    %v2104 = vld [vmem:[#allocation13 + $0x38] sm:$0xf]
    %v2105 = vld [vmem:[#allocation13 + $0x3c] sm:$0xf]
    %v2106 = vld [vmem:[#allocation13 + $0x40] sm:$0xf]
    %v2107 = vld [vmem:[#allocation13 + $0x44] sm:$0xf]
    %v2108 = vld [vmem:[#allocation13 + $0x48] sm:$0xf]
    %v2109 = vld [vmem:[#allocation13 + $0x4c] sm:$0xf]
    %v2110 = vld [vmem:[#allocation13 + $0x50] sm:$0xf]
    %v2111 = vld [vmem:[#allocation13 + $0x54] sm:$0xf]
    %v2112 = vld [vmem:[#allocation13 + $0x58] sm:$0xf]
    %v2113 = vld [vmem:[#allocation13 + $0x5c] sm:$0xf]
    %v2114 = vld [vmem:[#allocation13 + $0x60] sm:$0xf]
    %v2115 = vld [vmem:[#allocation13 + $0x64] sm:$0xf]
    %v2116 = vld [vmem:[#allocation13 + $0x68] sm:$0xf]
    %v2117 = vld [vmem:[#allocation13 + $0x6c] sm:$0xf]
    %v2118 = vld [vmem:[#allocation13 + $0x70] sm:$0xf]
    %v2119 = vld [vmem:[#allocation13 + $0x74] sm:$0xf]
    %v2120 = vld [vmem:[#allocation13 + $0x78] sm:$0xf]
    %v2121 = vld [vmem:[#allocation13 + $0x7c] sm:$0xf]
    %v2122 = vld [vmem:[#allocation13 + $0x80] sm:$0xf]
    %v2123 = vld [vmem:[#allocation13 + $0x84] sm:$0xf]
    %v2124 = vld [vmem:[#allocation13 + $0x88] sm:$0xf]
    %v2125 = vld [vmem:[#allocation13 + $0x8c] sm:$0xf]
    %v2126 = vld [vmem:[#allocation13 + $0x90] sm:$0xf]
    %v2127 = vld [vmem:[#allocation13 + $0x94] sm:$0xf]
    %v2128 = vld [vmem:[#allocation13 + $0x98] sm:$0xf]
    %v2129 = vld [vmem:[#allocation13 + $0x9c] sm:$0xf]
    %v2130 = vld [vmem:[#allocation13 + $0xa0] sm:$0xf]
    %v2131 = vld [vmem:[#allocation13 + $0xa4] sm:$0xf]
    %v2132 = vld [vmem:[#allocation13 + $0xa8] sm:$0xf]
    %v2133 = vld [vmem:[#allocation13 + $0xac] sm:$0xf]
    %v2134 = vld [vmem:[#allocation13 + $0xb0] sm:$0xf]
    %v2135 = vld [vmem:[#allocation13 + $0xb4] sm:$0xf]
    %v2136 = vld [vmem:[#allocation13 + $0xb8] sm:$0xf]
    %v2137 = vld [vmem:[#allocation13 + $0xbc] sm:$0xf]
    %v2138 = vld [vmem:[#allocation13 + $0xc0] sm:$0xf]
    %v2139 = vld [vmem:[#allocation13 + $0xc4] sm:$0xf]
    %v2140 = vld [vmem:[#allocation13 + $0xc8] sm:$0xf]
    %v2141 = vld [vmem:[#allocation13 + $0xcc] sm:$0xf]
    %v2142 = vld [vmem:[#allocation13 + $0xd0] sm:$0xf]
    %v2143 = vld [vmem:[#allocation13 + $0xd4] sm:$0xf]
    %v2144 = vld [vmem:[#allocation13 + $0xd8] sm:$0xf]
    %v2145 = vld [vmem:[#allocation13 + $0xdc] sm:$0xf]
    %v2146 = vld [vmem:[#allocation13 + $0xe0] sm:$0xf]
    %v2147 = vld [vmem:[#allocation13 + $0xe4] sm:$0xf]
    %v2148 = vld [vmem:[#allocation13 + $0xe8] sm:$0xf]
    %v2149 = vld [vmem:[#allocation13 + $0xec] sm:$0xf]
    %v2150 = vld [vmem:[#allocation13 + $0xf0] sm:$0xf]
    %v2151 = vld [vmem:[#allocation13 + $0xf4] sm:$0xf]
    %v2152 = vld [vmem:[#allocation13 + $0xf8] sm:$0xf]
    %v2153 = vld [vmem:[#allocation13 + $0xfc] sm:$0xf]
    %v2154 = vld [vmem:[%s14] sm:$0x1]
    %v2156 = vperm.slane %v2154, 0
    %v2222 = vunpack.c.l.b16 %v2090
    %v2223 = vunpack.c.l.b16 %v2091
    %v2224 = vunpack.c.l.b16 %v2092
    %v2225 = vunpack.c.l.b16 %v2093
    %v2226 = vunpack.c.l.b16 %v2094
    %v2227 = vunpack.c.l.b16 %v2095
    %v2228 = vunpack.c.l.b16 %v2096
    %v2229 = vunpack.c.l.b16 %v2097
    %v2230 = vunpack.c.l.b16 %v2098
    %v2231 = vunpack.c.l.b16 %v2099
    %v2232 = vunpack.c.l.b16 %v2100
    %v2233 = vunpack.c.l.b16 %v2101
    %v2234 = vunpack.c.l.b16 %v2102
    %v2235 = vunpack.c.l.b16 %v2103
    %v2236 = vunpack.c.l.b16 %v2104
    %v2237 = vunpack.c.l.b16 %v2105
    %v2238 = vunpack.c.l.b16 %v2106
    %v2239 = vunpack.c.l.b16 %v2107
    %v2240 = vunpack.c.l.b16 %v2108
    %v2241 = vunpack.c.l.b16 %v2109
    %v2242 = vunpack.c.l.b16 %v2110
    %v2243 = vunpack.c.l.b16 %v2111
    %v2244 = vunpack.c.l.b16 %v2112
    %v2245 = vunpack.c.l.b16 %v2113
    %v2246 = vunpack.c.l.b16 %v2114
    %v2247 = vunpack.c.l.b16 %v2115
    %v2248 = vunpack.c.l.b16 %v2116
    %v2249 = vunpack.c.l.b16 %v2117
    %v2250 = vunpack.c.l.b16 %v2118
    %v2251 = vunpack.c.l.b16 %v2119
    %v2252 = vunpack.c.l.b16 %v2120
    %v2253 = vunpack.c.l.b16 %v2121
    %v2254 = vunpack.c.l.b16 %v2122
    %v2255 = vunpack.c.l.b16 %v2123
    %v2256 = vunpack.c.l.b16 %v2124
    %v2257 = vunpack.c.l.b16 %v2125
    %v2258 = vunpack.c.l.b16 %v2126
    %v2259 = vunpack.c.l.b16 %v2127
    %v2260 = vunpack.c.l.b16 %v2128
    %v2261 = vunpack.c.l.b16 %v2129
    %v2262 = vunpack.c.l.b16 %v2130
    %v2263 = vunpack.c.l.b16 %v2131
    %v2264 = vunpack.c.l.b16 %v2132
    %v2265 = vunpack.c.l.b16 %v2133
    %v2266 = vunpack.c.l.b16 %v2134
    %v2267 = vunpack.c.l.b16 %v2135
    %v2268 = vunpack.c.l.b16 %v2136
    %v2269 = vunpack.c.l.b16 %v2137
    %v2270 = vunpack.c.l.b16 %v2138
    %v2271 = vunpack.c.l.b16 %v2139
    %v2272 = vunpack.c.l.b16 %v2140
    %v2273 = vunpack.c.l.b16 %v2141
    %v2274 = vunpack.c.l.b16 %v2142
    %v2275 = vunpack.c.l.b16 %v2143
    %v2276 = vunpack.c.l.b16 %v2144
    %v2277 = vunpack.c.l.b16 %v2145
    %v2278 = vunpack.c.l.b16 %v2146
    %v2279 = vunpack.c.l.b16 %v2147
    %v2280 = vunpack.c.l.b16 %v2148
    %v2281 = vunpack.c.l.b16 %v2149
    %v2282 = vunpack.c.l.b16 %v2150
    %v2283 = vunpack.c.l.b16 %v2151
    %v2284 = vunpack.c.l.b16 %v2152
    %v2285 = vunpack.c.l.b16 %v2153
    %v2286 = vpack.c.b16 %v2223, %v2222
    %v2287 = vpack.c.b16 %v2225, %v2224
    %v2288 = vpack.c.b16 %v2227, %v2226
    %v2289 = vpack.c.b16 %v2229, %v2228
    %v2290 = vpack.c.b16 %v2231, %v2230
    %v2291 = vpack.c.b16 %v2233, %v2232
    %v2292 = vpack.c.b16 %v2235, %v2234
    %v2293 = vpack.c.b16 %v2237, %v2236
    %v2294 = vpack.c.b16 %v2239, %v2238
    %v2295 = vpack.c.b16 %v2241, %v2240
    %v2296 = vpack.c.b16 %v2243, %v2242
    %v2297 = vpack.c.b16 %v2245, %v2244
    %v2298 = vpack.c.b16 %v2247, %v2246
    %v2299 = vpack.c.b16 %v2249, %v2248
    %v2300 = vpack.c.b16 %v2251, %v2250
    %v2301 = vpack.c.b16 %v2253, %v2252
    %v2302 = vpack.c.b16 %v2255, %v2254
    %v2303 = vpack.c.b16 %v2257, %v2256
    %v2304 = vpack.c.b16 %v2259, %v2258
    %v2305 = vpack.c.b16 %v2261, %v2260
    %v2306 = vpack.c.b16 %v2263, %v2262
    %v2307 = vpack.c.b16 %v2265, %v2264
    %v2308 = vpack.c.b16 %v2267, %v2266
    %v2309 = vpack.c.b16 %v2269, %v2268
    %v2310 = vpack.c.b16 %v2271, %v2270
    %v2311 = vpack.c.b16 %v2273, %v2272
    %v2312 = vpack.c.b16 %v2275, %v2274
    %v2313 = vpack.c.b16 %v2277, %v2276
    %v2314 = vpack.c.b16 %v2279, %v2278
    %v2315 = vpack.c.b16 %v2281, %v2280
    %v2316 = vpack.c.b16 %v2283, %v2282
    %v2317 = vpack.c.b16 %v2285, %v2284
    %2350 = vmatpush.bf16.msra.mxu0 %v2293
    %2351 = vmatpush.bf16.msra.mxu0 %v2292
    %2352 = vmatpush.bf16.msra.mxu0 %v2291
    %2353 = vmatpush.bf16.msra.mxu0 %v2290
    %2354 = vmatpush.bf16.msra.mxu0 %v2289
    %2355 = vmatpush.bf16.msra.mxu0 %v2288
    %2356 = vmatpush.bf16.msra.mxu0 %v2287
    %2357 = vmatpush.bf16.msra.mxu0 %v2286
    %2358 = vmatmul.bf16.gmra.mxu0 %v2086
    %v2359 = vpop.f32.mrf.mxu0
    %v2360 = vadd.f32 %v2156, %v2359
    %v2361 = vpop.f32.mrf.mxu0
    %2362 = vdwg.mxu0
    %2363 = vmatpush.bf16.msra.mxu0 %v2301
    %2364 = vmatpush.bf16.msra.mxu0 %v2300
    %2365 = vmatpush.bf16.msra.mxu0 %v2299
    %2366 = vmatpush.bf16.msra.mxu0 %v2298
    %2367 = vmatpush.bf16.msra.mxu0 %v2297
    %2368 = vmatpush.bf16.msra.mxu0 %v2296
    %2369 = vmatpush.bf16.msra.mxu0 %v2295
    %2370 = vmatpush.bf16.msra.mxu0 %v2294
    %2371 = vmatmul.bf16.gmra.mxu0 %v2087
    %v2372 = vpop.f32.mrf.mxu0
    %v2373 = vadd.f32 %v2360, %v2372
    %v2374 = vpop.f32.mrf.mxu0
    %2375 = vdwg.mxu0
    %2376 = vmatpush.bf16.msra.mxu0 %v2309
    %2377 = vmatpush.bf16.msra.mxu0 %v2308
    %2378 = vmatpush.bf16.msra.mxu0 %v2307
    %2379 = vmatpush.bf16.msra.mxu0 %v2306
    %2380 = vmatpush.bf16.msra.mxu0 %v2305
    %2381 = vmatpush.bf16.msra.mxu0 %v2304
    %2382 = vmatpush.bf16.msra.mxu0 %v2303
    %2383 = vmatpush.bf16.msra.mxu0 %v2302
    %2384 = vmatmul.bf16.gmra.mxu0 %v2088
    %v2385 = vpop.f32.mrf.mxu0
    %v2386 = vadd.f32 %v2373, %v2385
    %v2387 = vpop.f32.mrf.mxu0
    %2388 = vdwg.mxu0
    %2389 = vmatpush.bf16.msra.mxu0 %v2317
    %2390 = vmatpush.bf16.msra.mxu0 %v2316
    %2391 = vmatpush.bf16.msra.mxu0 %v2315
    %2392 = vmatpush.bf16.msra.mxu0 %v2314
    %2393 = vmatpush.bf16.msra.mxu0 %v2313
    %2394 = vmatpush.bf16.msra.mxu0 %v2312
    %2395 = vmatpush.bf16.msra.mxu0 %v2311
    %2396 = vmatpush.bf16.msra.mxu0 %v2310
    %2397 = vmatmul.bf16.gmra.mxu0 %v2089
    %v2398 = vpop.f32.mrf.mxu0
    %v2399 = vadd.f32 %v2386, %v2398
    %v2400 = vpop.f32.mrf.mxu0
    %2401 = vdwg.mxu0
    %2402 = vst [vmem:[#allocation14] sm:$0x3] %v2399
    // Predicated region
    $region90: #{tpu_custom_call.1} parent=1 // pred_check
      _
    $region91: #{tpu_custom_call.1} parent=1 // pred_check_branch
      %2404 = sbr.rel (0) target = $region93
    $region92: #{tpu_custom_call.1} parent=1 // pred_region
      %2406 = vsyncadd [#allocation4], 0
      %s2408 = sshll.u32 [#allocation14], 4
      %s2409 = int_to_ptr.vmem [resolvable:$true] %s2408
      %s2410 = sshll.u32 %s15, 4
      %s2411 = int_to_ptr.hbm [resolvable:$true] %s2410
      %2413 = dma.vmem_to_hbm [thread:$0]  %s2409, 32, %s2411, [#allocation4]
    $region93: #{tpu_custom_call.1} parent=1 // pred_fallthru
      _
    // Predicated region
    $region94: #{tpu_custom_call.1} parent=1 // pred_check
      _
    $region95: #{tpu_custom_call.1} parent=1 // pred_check_branch
      %2415 = sbr.rel (0) target = $region97
    $region96: #{tpu_custom_call.1} parent=1 // pred_region
      %2417 = dma.done [#allocation4], 32
    $region97: #{tpu_custom_call.1} parent=1 // pred_fallthru
      _
    %2418 = vsyncpa [#allocation3], 1
    %2419 = vsyncpa [#allocation6], 1
    %2420 = vsyncpa [#allocation9], 1
    %2421 = vsyncpa [#allocation12], 1
    %2422 = vsyncpa [#allocation4], 1

</llo_original>
